<compile_context>
chip_gen: v6e
topology: v6e:2x2x1
jax: 0.10.0
libtpu: 0.0.40
codegen_flags: <defaults>
</compile_context>

<pallas_src>
import functools

import jax
import jax.numpy as jnp
from jax.experimental import pallas as pl
from jax.experimental.pallas import tpu as pltpu

BN_EPS = 1e-5


def _meta_fusion_kernel(
    # batch-tiled inputs
    e_ref,      # (bt, sum(model_dims))  bf16   concatenated embeddings
    meta_ref,   # (bt, meta_dim)         bf16
    # resident weights
    wp_ref,     # (sum(model_dims), H)   bf16   stacked projection weights
    bp_ref,     # (num_models, H)        f32    stacked projection biases
    wm1_ref, bm1_ref,   # meta_net layer 1: (meta_dim, H) bf16 / (1, H) f32
    wm2_ref, bm2_ref,   # meta_net layer 2: (H, H) bf16 / (1, H) f32
    wm3_ref, bm3_ref,   # meta_net layer 3: (num_models, H) f32 / (1, num_models) f32
    wc1_ref, bc1_ref,   # classifier layer 1: (H, H) bf16 / (1, H) f32
    wc2_ref, bc2_ref,   # classifier layer 2 (BN folded): (H, C) bf16 / (1, C) f32
    # outputs
    out_ref,    # (bt, C)            f32
    fw_ref,     # (bt, num_models)   f32
    *,
    split_ends,  # cumulative end offsets of each model's lane segment
):
    f32 = jnp.float32
    bf16 = jnp.bfloat16
    nm = len(split_ends)

    # ---- meta_net: Linear -> ReLU -> Linear -> ReLU -> Linear(H, nm) -> Softmax
    h1 = jnp.maximum(
        jnp.dot(meta_ref[...], wm1_ref[...], preferred_element_type=f32)
        + bm1_ref[...], 0.0)
    h2 = jnp.maximum(
        jnp.dot(h1.astype(bf16), wm2_ref[...], preferred_element_type=f32)
        + bm2_ref[...], 0.0)

    wm3 = wm3_ref[...]
    bm3 = bm3_ref[...]
    # last layer has only `nm` outputs -> do it as lane reductions (no tiny matmul)
    logits = [
        jnp.sum(h2 * wm3[i:i + 1, :], axis=-1, keepdims=True) + bm3[:, i:i + 1]
        for i in range(nm)
    ]
    mx = functools.reduce(jnp.maximum, logits)
    exps = [jnp.exp(l - mx) for l in logits]
    inv = pl.reciprocal(sum(exps), approx=True)     # EUP slot instead of VALU divide
    ws = [e * inv for e in exps]                    # list of (bt, 1) fusion weights

    # direct column stores (no lane concatenate)
    for i in range(nm):
        fw_ref[:, i:i + 1] = ws[i]

    # ---- fused projection in a single MXU pass -------------------------------
    # sum_i w_i * (e_i @ Wp_i + bp_i) == concat_i(w_i * e_i) @ vstack(Wp_i)
    #                                    + sum_i w_i * bp_i
    lane = jax.lax.broadcasted_iota(jnp.int32, e_ref.shape, 1)
    scale = ws[nm - 1]
    for i in range(nm - 2, -1, -1):
        scale = jnp.where(lane < split_ends[i], ws[i], scale)
    x_scaled = (e_ref[...].astype(f32) * scale).astype(bf16)

    bp = bp_ref[...]
    bias = sum(ws[i] * bp[i:i + 1, :] for i in range(nm))
    fused = jnp.dot(x_scaled, wp_ref[...], preferred_element_type=f32) + bias

    # ---- classifier: Linear -> ReLU -> (BN folded into final Linear) -> Linear
    h = jnp.maximum(
        jnp.dot(fused.astype(bf16), wc1_ref[...], preferred_element_type=f32)
        + bc1_ref[...], 0.0)
    out_ref[...] = (
        jnp.dot(h.astype(bf16), wc2_ref[...], preferred_element_type=f32)
        + bc2_ref[...])


def meta_fusion(embeddings, meta_features, params, *, block_batch=None):
    """embeddings: list of (B, dim_i) f32; meta_features: (B, meta_dim) f32."""
    f32, bf16 = jnp.float32, jnp.bfloat16
    b = embeddings[0].shape[0]
    dims = tuple(int(e.shape[1]) for e in embeddings)
    num_models = len(dims)
    d_total = sum(dims)
    meta_dim = int(meta_features.shape[1])
    num_classes = int(params["wc2"].shape[1])

    if block_batch is None:
        block_batch = min(b, 256)          # sized well under v7x's 64 MiB VMEM
    assert b % block_batch == 0, "batch must be divisible by block_batch"
    grid = (b // block_batch,)

    # Fold eval-mode BatchNorm1d (running stats) into the final Linear (exact).
    bn_scale = params["bn_gamma"] / jnp.sqrt(params["bn_var"] + BN_EPS)
    bn_shift = params["bn_beta"] - params["bn_mean"] * bn_scale
    wc2_f = (bn_scale[:, None] * params["wc2"]).astype(bf16)
    bc2_f = (bn_shift[None, :] @ params["wc2"] + params["bc2"]).astype(f32)

    # Concatenate embeddings / stack projection weights so the weighted fusion
    # becomes a single wide matmul inside the kernel.
    e_cat = jnp.concatenate(embeddings, axis=1).astype(bf16)
    wp_stack = jnp.concatenate(
        [params[f"wp{i}"] for i in range(num_models)], axis=0).astype(bf16)
    bp_stack = jnp.concatenate(
        [params[f"bp{i}"] for i in range(num_models)], axis=0).astype(f32)

    args = (
        e_cat, meta_features.astype(bf16),
        wp_stack, bp_stack,
        params["wm1"].astype(bf16), params["bm1"].astype(f32),
        params["wm2"].astype(bf16), params["bm2"].astype(f32),
        params["wm3"].astype(f32), params["bm3"].astype(f32),
        params["wc1"].astype(bf16), params["bc1"].astype(f32),
        wc2_f, bc2_f,
    )

    def batch_spec(feat):
        return pl.BlockSpec((block_batch, feat), lambda i: (i, 0))

    def resident_spec(arr):
        # full-shape block, same index every iteration -> stays VMEM-resident
        return pl.BlockSpec(arr.shape, lambda i: (0, 0))

    in_specs = [batch_spec(d_total), batch_spec(meta_dim)] + [
        resident_spec(a) for a in args[2:]
    ]
    out_specs = (batch_spec(num_classes), batch_spec(num_models))
    out_shape = (
        jax.ShapeDtypeStruct((b, num_classes), f32),
        jax.ShapeDtypeStruct((b, num_models), f32),
    )

    split_ends = tuple(sum(dims[: i + 1]) for i in range(num_models))
    kernel = functools.partial(_meta_fusion_kernel, split_ends=split_ends)

    return pl.pallas_call(
        kernel,
        grid=grid,
        in_specs=in_specs,
        out_specs=out_specs,
        out_shape=out_shape,
        compiler_params=pltpu.CompilerParams(
            dimension_semantics=("parallel",),      # megacore / v7x 2-TC sharding
            vmem_limit_bytes=32 * 1024 * 1024,
        ),
    )(*args)


# ---------------------------- reference (pure JAX, f32) ----------------------
def meta_fusion_ref(embeddings, meta_features, params):
    nm = len(embeddings)
    proj = [embeddings[i] @ params[f"wp{i}"] + params[f"bp{i}"] for i in range(nm)]
    h = jnp.maximum(meta_features @ params["wm1"] + params["bm1"], 0.0)
    h = jnp.maximum(h @ params["wm2"] + params["bm2"], 0.0)
    logits = h @ params["wm3"].T + params["bm3"]
    w = jax.nn.softmax(logits, axis=1)
    fused = sum(w[:, i:i + 1] * proj[i] for i in range(nm))

    bn_scale = params["bn_gamma"] / jnp.sqrt(params["bn_var"] + BN_EPS)
    bn_shift = params["bn_beta"] - params["bn_mean"] * bn_scale
    h = jnp.maximum(fused @ params["wc1"] + params["bc1"], 0.0)
    h = h * bn_scale + bn_shift
    out = h @ params["wc2"] + params["bc2"]
    return out, w


# --------------------------- deterministic params ----------------------------
def init_params(key, model_dims, meta_dim, hidden, num_classes):
    params = {}

    def linear(k, fan_in, fan_out):
        bound = 1.0 / (fan_in ** 0.5)
        kw, kb = jax.random.split(k)
        w = jax.random.uniform(kw, (fan_in, fan_out), jnp.float32, -bound, bound)
        b = jax.random.uniform(kb, (1, fan_out), jnp.float32, -bound, bound)
        return w, b

    keys = jax.random.split(key, 12)
    for i, dim in enumerate(model_dims):
        params[f"wp{i}"], params[f"bp{i}"] = linear(keys[i], dim, hidden)
    params["wm1"], params["bm1"] = linear(keys[3], meta_dim, hidden)
    params["wm2"], params["bm2"] = linear(keys[4], hidden, hidden)
    w3, b3 = linear(keys[5], hidden, len(model_dims))
    params["wm3"] = w3.T            # stored as (num_models, hidden)
    params["bm3"] = b3              # (1, num_models)
    params["wc1"], params["bc1"] = linear(keys[6], hidden, hidden)
    params["wc2"], params["bc2"] = linear(keys[7], hidden, num_classes)
    # non-trivial BatchNorm running stats so the BN-fold is actually exercised
    params["bn_gamma"] = 1.0 + 0.2 * jax.random.normal(keys[8], (hidden,), jnp.float32)
    params["bn_beta"] = 0.1 * jax.random.normal(keys[9], (hidden,), jnp.float32)
    params["bn_mean"] = 0.1 * jax.random.normal(keys[10], (hidden,), jnp.float32)
    params["bn_var"] = jax.random.uniform(keys[11], (hidden,), jnp.float32, 0.5, 1.5)
    return params


if __name__ == "__main__":
    MODEL_DIMS = (512, 32, 256)   # Rawnet3 / AASIST / RawGAT_ST embedding dims
    META_DIM = 64
    HIDDEN = 128
    NUM_CLASSES = 2
    B = 8

    key = jax.random.PRNGKey(0)
    k_e, k_m, k_p = jax.random.split(key, 3)
    ke = jax.random.split(k_e, len(MODEL_DIMS))
    embeddings = [
        jax.random.normal(ke[i], (B, MODEL_DIMS[i]), jnp.float32)
        for i in range(len(MODEL_DIMS))
    ]
    meta_features = jax.random.normal(k_m, (B, META_DIM), jnp.float32)
    params = init_params(k_p, MODEL_DIMS, META_DIM, HIDDEN, NUM_CLASSES)

    out, fw = jax.block_until_ready(meta_fusion(embeddings, meta_features, params))
    ref_out, ref_fw = meta_fusion_ref(embeddings, meta_features, params)

    assert out.shape == (B, NUM_CLASSES) and fw.shape == (B, len(MODEL_DIMS))
    # bf16 MXU operands + approx reciprocal -> loosened tolerances vs f32 reference
    assert jnp.allclose(out, ref_out, atol=3e-2, rtol=3e-2), (
        float(jnp.max(jnp.abs(out - ref_out))))
    assert jnp.allclose(fw, ref_fw, atol=1e-2, rtol=1e-2), (
        float(jnp.max(jnp.abs(fw - ref_fw))))
    print("KERNEL_OK")
</pallas_src>

<mosaic_0001>
module attributes {stable_mosaic.version = 11 : i64} {
  func.func @_meta_fusion_kernel(%arg0: i32, %arg1: memref<8x800xbf16, #tpu.memory_space<vmem>>, %arg2: memref<8x64xbf16, #tpu.memory_space<vmem>>, %arg3: memref<800x128xbf16, #tpu.memory_space<vmem>>, %arg4: memref<3x128xf32, #tpu.memory_space<vmem>>, %arg5: memref<64x128xbf16, #tpu.memory_space<vmem>>, %arg6: memref<1x128xf32, #tpu.memory_space<vmem>>, %arg7: memref<128x128xbf16, #tpu.memory_space<vmem>>, %arg8: memref<1x128xf32, #tpu.memory_space<vmem>>, %arg9: memref<3x128xf32, #tpu.memory_space<vmem>>, %arg10: memref<1x3xf32, #tpu.memory_space<vmem>>, %arg11: memref<128x128xbf16, #tpu.memory_space<vmem>>, %arg12: memref<1x128xf32, #tpu.memory_space<vmem>>, %arg13: memref<128x2xbf16, #tpu.memory_space<vmem>>, %arg14: memref<1x2xf32, #tpu.memory_space<vmem>>, %arg15: memref<8x2xf32, #tpu.memory_space<vmem>>, %arg16: memref<8x3xf32, #tpu.memory_space<vmem>>) attributes {dimension_semantics = [#tpu.dimension_semantics<parallel>], iteration_bounds = array<i64: 1>, scalar_prefetch = 0 : i64, scratch_operands = 0 : i64, tpu.core_type = #tpu.core_type<tc>, window_params = [{transform_indices = @transform_0, window_bounds = array<i64: 8, 800>}, {transform_indices = @transform_1, window_bounds = array<i64: 8, 64>}, {pipeline_mode = #tpu.pipeline_mode<synchronous>, transform_indices = @transform_2, window_bounds = array<i64: 800, 128>}, {pipeline_mode = #tpu.pipeline_mode<synchronous>, transform_indices = @transform_3, window_bounds = array<i64: 3, 128>}, {pipeline_mode = #tpu.pipeline_mode<synchronous>, transform_indices = @transform_4, window_bounds = array<i64: 64, 128>}, {pipeline_mode = #tpu.pipeline_mode<synchronous>, transform_indices = @transform_5, window_bounds = array<i64: 1, 128>}, {pipeline_mode = #tpu.pipeline_mode<synchronous>, transform_indices = @transform_6, window_bounds = array<i64: 128, 128>}, {pipeline_mode = #tpu.pipeline_mode<synchronous>, transform_indices = @transform_7, window_bounds = array<i64: 1, 128>}, {pipeline_mode = #tpu.pipeline_mode<synchronous>, transform_indices = @transform_8, window_bounds = array<i64: 3, 128>}, {pipeline_mode = #tpu.pipeline_mode<synchronous>, transform_indices = @transform_9, window_bounds = array<i64: 1, 3>}, {pipeline_mode = #tpu.pipeline_mode<synchronous>, transform_indices = @transform_10, window_bounds = array<i64: 128, 128>}, {pipeline_mode = #tpu.pipeline_mode<synchronous>, transform_indices = @transform_11, window_bounds = array<i64: 1, 128>}, {pipeline_mode = #tpu.pipeline_mode<synchronous>, transform_indices = @transform_12, window_bounds = array<i64: 128, 2>}, {pipeline_mode = #tpu.pipeline_mode<synchronous>, transform_indices = @transform_13, window_bounds = array<i64: 1, 2>}, {transform_indices = @transform_14, window_bounds = array<i64: 8, 2>}, {transform_indices = @transform_15, window_bounds = array<i64: 8, 3>}]} {
    %c0 = arith.constant 0 : index
    %c0_0 = arith.constant 0 : index
    %0 = vector.load %arg2[%c0, %c0_0] : memref<8x64xbf16, #tpu.memory_space<vmem>>, vector<8x64xbf16>
    %c0_1 = arith.constant 0 : index
    %c0_2 = arith.constant 0 : index
    %1 = vector.load %arg5[%c0_1, %c0_2] : memref<64x128xbf16, #tpu.memory_space<vmem>>, vector<64x128xbf16>
    %cst = arith.constant dense<0.000000e+00> : vector<8x128xf32>
    %2 = tpu.matmul %0, %1, %cst {dimension_numbers = #tpu.dot_dimension_numbers<[1], [0], [0], [1], [0, 0, 1, 1], [], []>} : vector<8x64xbf16>, vector<64x128xbf16>, vector<8x128xf32> -> vector<8x128xf32>
    %c0_3 = arith.constant 0 : index
    %c0_4 = arith.constant 0 : index
    %3 = vector.load %arg6[%c0_3, %c0_4] : memref<1x128xf32, #tpu.memory_space<vmem>>, vector<1x128xf32>
    %4 = vector.broadcast %3 : vector<1x128xf32> to vector<8x128xf32>
    %5 = arith.addf %2, %4 : vector<8x128xf32>
    %cst_5 = arith.constant 0.000000e+00 : f32
    %6 = vector.broadcast %cst_5 : f32 to vector<8x128xf32>
    %7 = arith.maximumf %5, %6 : vector<8x128xf32>
    %8 = arith.truncf %7 : vector<8x128xf32> to vector<8x128xbf16>
    %c0_6 = arith.constant 0 : index
    %c0_7 = arith.constant 0 : index
    %9 = vector.load %arg7[%c0_6, %c0_7] : memref<128x128xbf16, #tpu.memory_space<vmem>>, vector<128x128xbf16>
    %cst_8 = arith.constant dense<0.000000e+00> : vector<8x128xf32>
    %10 = tpu.matmul %8, %9, %cst_8 {dimension_numbers = #tpu.dot_dimension_numbers<[1], [0], [0], [1], [0, 0, 1, 1], [], []>} : vector<8x128xbf16>, vector<128x128xbf16>, vector<8x128xf32> -> vector<8x128xf32>
    %c0_9 = arith.constant 0 : index
    %c0_10 = arith.constant 0 : index
    %11 = vector.load %arg8[%c0_9, %c0_10] : memref<1x128xf32, #tpu.memory_space<vmem>>, vector<1x128xf32>
    %12 = vector.broadcast %11 : vector<1x128xf32> to vector<8x128xf32>
    %13 = arith.addf %10, %12 : vector<8x128xf32>
    %cst_11 = arith.constant 0.000000e+00 : f32
    %14 = vector.broadcast %cst_11 : f32 to vector<8x128xf32>
    %15 = arith.maximumf %13, %14 : vector<8x128xf32>
    %c0_12 = arith.constant 0 : index
    %c0_13 = arith.constant 0 : index
    %16 = vector.load %arg9[%c0_12, %c0_13] : memref<3x128xf32, #tpu.memory_space<vmem>>, vector<3x128xf32>
    %c0_14 = arith.constant 0 : index
    %c0_15 = arith.constant 0 : index
    %17 = vector.load %arg10[%c0_14, %c0_15] : memref<1x3xf32, #tpu.memory_space<vmem>>, vector<1x3xf32>
    %18 = vector.extract_strided_slice %16 {offsets = [0, 0], sizes = [1, 128], strides = [1, 1]} : vector<3x128xf32> to vector<1x128xf32>
    %19 = vector.broadcast %18 : vector<1x128xf32> to vector<8x128xf32>
    %20 = arith.mulf %15, %19 : vector<8x128xf32>
    %cst_16 = arith.constant dense<0.000000e+00> : vector<8xf32>
    %21 = vector.multi_reduction <add>, %20, %cst_16 [1] : vector<8x128xf32> to vector<8xf32>
    %22 = vector.shape_cast %21 : vector<8xf32> to vector<8x1xf32>
    %23 = vector.extract_strided_slice %17 {offsets = [0, 0], sizes = [1, 1], strides = [1, 1]} : vector<1x3xf32> to vector<1x1xf32>
    %24 = vector.broadcast %23 : vector<1x1xf32> to vector<8x1xf32>
    %25 = arith.addf %22, %24 : vector<8x1xf32>
    %26 = vector.extract_strided_slice %16 {offsets = [1, 0], sizes = [1, 128], strides = [1, 1]} : vector<3x128xf32> to vector<1x128xf32>
    %27 = vector.broadcast %26 : vector<1x128xf32> to vector<8x128xf32>
    %28 = arith.mulf %15, %27 : vector<8x128xf32>
    %cst_17 = arith.constant dense<0.000000e+00> : vector<8xf32>
    %29 = vector.multi_reduction <add>, %28, %cst_17 [1] : vector<8x128xf32> to vector<8xf32>
    %30 = vector.shape_cast %29 : vector<8xf32> to vector<8x1xf32>
    %31 = vector.extract_strided_slice %17 {offsets = [0, 1], sizes = [1, 1], strides = [1, 1]} : vector<1x3xf32> to vector<1x1xf32>
    %32 = vector.broadcast %31 : vector<1x1xf32> to vector<8x1xf32>
    %33 = arith.addf %30, %32 : vector<8x1xf32>
    %34 = vector.extract_strided_slice %16 {offsets = [2, 0], sizes = [1, 128], strides = [1, 1]} : vector<3x128xf32> to vector<1x128xf32>
    %35 = vector.broadcast %34 : vector<1x128xf32> to vector<8x128xf32>
    %36 = arith.mulf %15, %35 : vector<8x128xf32>
    %cst_18 = arith.constant dense<0.000000e+00> : vector<8xf32>
    %37 = vector.multi_reduction <add>, %36, %cst_18 [1] : vector<8x128xf32> to vector<8xf32>
    %38 = vector.shape_cast %37 : vector<8xf32> to vector<8x1xf32>
    %39 = vector.extract_strided_slice %17 {offsets = [0, 2], sizes = [1, 1], strides = [1, 1]} : vector<1x3xf32> to vector<1x1xf32>
    %40 = vector.broadcast %39 : vector<1x1xf32> to vector<8x1xf32>
    %41 = arith.addf %38, %40 : vector<8x1xf32>
    %42 = arith.maximumf %25, %33 : vector<8x1xf32>
    %43 = arith.maximumf %42, %41 : vector<8x1xf32>
    %44 = arith.subf %25, %43 : vector<8x1xf32>
    %45 = math.exp %44 : vector<8x1xf32>
    %46 = arith.subf %33, %43 : vector<8x1xf32>
    %47 = math.exp %46 : vector<8x1xf32>
    %48 = arith.subf %41, %43 : vector<8x1xf32>
    %49 = math.exp %48 : vector<8x1xf32>
    %cst_19 = arith.constant 0.000000e+00 : f32
    %50 = vector.broadcast %cst_19 : f32 to vector<8x1xf32>
    %51 = arith.addf %50, %45 : vector<8x1xf32>
    %52 = arith.addf %51, %47 : vector<8x1xf32>
    %53 = arith.addf %52, %49 : vector<8x1xf32>
    %54 = tpu.reciprocal %53 {approx = true} : vector<8x1xf32> -> vector<8x1xf32>
    %55 = arith.mulf %45, %54 : vector<8x1xf32>
    %56 = arith.mulf %47, %54 : vector<8x1xf32>
    %57 = arith.mulf %49, %54 : vector<8x1xf32>
    %c0_20 = arith.constant 0 : index
    %c0_21 = arith.constant 0 : index
    %58 = vector.load %arg16[%c0_20, %c0_21] : memref<8x3xf32, #tpu.memory_space<vmem>>, vector<8x1xf32>
    tpu.vector_store %arg16[%c0_20, %c0_21], %55 {strides = array<i32>} : memref<8x3xf32, #tpu.memory_space<vmem>>, vector<8x1xf32>,
    %c0_22 = arith.constant 0 : index
    %c1 = arith.constant 1 : index
    %59 = vector.load %arg16[%c0_22, %c1] : memref<8x3xf32, #tpu.memory_space<vmem>>, vector<8x1xf32>
    tpu.vector_store %arg16[%c0_22, %c1], %56 {strides = array<i32>} : memref<8x3xf32, #tpu.memory_space<vmem>>, vector<8x1xf32>,
    %c0_23 = arith.constant 0 : index
    %c2 = arith.constant 2 : index
    %60 = vector.load %arg16[%c0_23, %c2] : memref<8x3xf32, #tpu.memory_space<vmem>>, vector<8x1xf32>
    tpu.vector_store %arg16[%c0_23, %c2], %57 {strides = array<i32>} : memref<8x3xf32, #tpu.memory_space<vmem>>, vector<8x1xf32>,
    %61 = tpu.iota {dimensions = array<i32: 1>} : vector<8x800xi32>
    %c544_i32 = arith.constant 544 : i32
    %62 = vector.broadcast %c544_i32 : i32 to vector<8x800xi32>
    %63 = arith.cmpi slt, %61, %62 : vector<8x800xi32>
    %64 = vector.shape_cast %56 : vector<8x1xf32> to vector<8x1xf32>
    %65 = vector.broadcast %64 : vector<8x1xf32> to vector<8x800xf32>
    %66 = vector.shape_cast %57 : vector<8x1xf32> to vector<8x1xf32>
    %67 = vector.broadcast %66 : vector<8x1xf32> to vector<8x800xf32>
    %68 = arith.select %63, %65, %67 : vector<8x800xi1>, vector<8x800xf32>
    %c512_i32 = arith.constant 512 : i32
    %69 = vector.broadcast %c512_i32 : i32 to vector<8x800xi32>
    %70 = arith.cmpi slt, %61, %69 : vector<8x800xi32>
    %71 = vector.shape_cast %55 : vector<8x1xf32> to vector<8x1xf32>
    %72 = vector.broadcast %71 : vector<8x1xf32> to vector<8x800xf32>
    %73 = arith.select %70, %72, %68 : vector<8x800xi1>, vector<8x800xf32>
    %c0_24 = arith.constant 0 : index
    %c0_25 = arith.constant 0 : index
    %74 = vector.load %arg1[%c0_24, %c0_25] : memref<8x800xbf16, #tpu.memory_space<vmem>>, vector<8x800xbf16>
    %75 = arith.extf %74 : vector<8x800xbf16> to vector<8x800xf32>
    %76 = arith.mulf %75, %73 : vector<8x800xf32>
    %77 = arith.truncf %76 : vector<8x800xf32> to vector<8x800xbf16>
    %c0_26 = arith.constant 0 : index
    %c0_27 = arith.constant 0 : index
    %78 = vector.load %arg4[%c0_26, %c0_27] : memref<3x128xf32, #tpu.memory_space<vmem>>, vector<3x128xf32>
    %79 = vector.extract_strided_slice %78 {offsets = [0, 0], sizes = [1, 128], strides = [1, 1]} : vector<3x128xf32> to vector<1x128xf32>
    %80 = vector.broadcast %55 : vector<8x1xf32> to vector<8x128xf32>
    %81 = vector.broadcast %79 : vector<1x128xf32> to vector<8x128xf32>
    %82 = arith.mulf %80, %81 : vector<8x128xf32>
    %cst_28 = arith.constant 0.000000e+00 : f32
    %83 = vector.broadcast %cst_28 : f32 to vector<8x128xf32>
    %84 = arith.addf %83, %82 : vector<8x128xf32>
    %85 = vector.extract_strided_slice %78 {offsets = [1, 0], sizes = [1, 128], strides = [1, 1]} : vector<3x128xf32> to vector<1x128xf32>
    %86 = vector.broadcast %56 : vector<8x1xf32> to vector<8x128xf32>
    %87 = vector.broadcast %85 : vector<1x128xf32> to vector<8x128xf32>
    %88 = arith.mulf %86, %87 : vector<8x128xf32>
    %89 = arith.addf %84, %88 : vector<8x128xf32>
    %90 = vector.extract_strided_slice %78 {offsets = [2, 0], sizes = [1, 128], strides = [1, 1]} : vector<3x128xf32> to vector<1x128xf32>
    %91 = vector.broadcast %57 : vector<8x1xf32> to vector<8x128xf32>
    %92 = vector.broadcast %90 : vector<1x128xf32> to vector<8x128xf32>
    %93 = arith.mulf %91, %92 : vector<8x128xf32>
    %94 = arith.addf %89, %93 : vector<8x128xf32>
    %c0_29 = arith.constant 0 : index
    %c0_30 = arith.constant 0 : index
    %95 = vector.load %arg3[%c0_29, %c0_30] : memref<800x128xbf16, #tpu.memory_space<vmem>>, vector<800x128xbf16>
    %cst_31 = arith.constant dense<0.000000e+00> : vector<8x128xf32>
    %96 = tpu.matmul %77, %95, %cst_31 {dimension_numbers = #tpu.dot_dimension_numbers<[1], [0], [0], [1], [0, 0, 1, 1], [], []>} : vector<8x800xbf16>, vector<800x128xbf16>, vector<8x128xf32> -> vector<8x128xf32>
    %97 = arith.addf %96, %94 : vector<8x128xf32>
    %98 = arith.truncf %97 : vector<8x128xf32> to vector<8x128xbf16>
    %c0_32 = arith.constant 0 : index
    %c0_33 = arith.constant 0 : index
    %99 = vector.load %arg11[%c0_32, %c0_33] : memref<128x128xbf16, #tpu.memory_space<vmem>>, vector<128x128xbf16>
    %cst_34 = arith.constant dense<0.000000e+00> : vector<8x128xf32>
    %100 = tpu.matmul %98, %99, %cst_34 {dimension_numbers = #tpu.dot_dimension_numbers<[1], [0], [0], [1], [0, 0, 1, 1], [], []>} : vector<8x128xbf16>, vector<128x128xbf16>, vector<8x128xf32> -> vector<8x128xf32>
    %c0_35 = arith.constant 0 : index
    %c0_36 = arith.constant 0 : index
    %101 = vector.load %arg12[%c0_35, %c0_36] : memref<1x128xf32, #tpu.memory_space<vmem>>, vector<1x128xf32>
    %102 = vector.broadcast %101 : vector<1x128xf32> to vector<8x128xf32>
    %103 = arith.addf %100, %102 : vector<8x128xf32>
    %cst_37 = arith.constant 0.000000e+00 : f32
    %104 = vector.broadcast %cst_37 : f32 to vector<8x128xf32>
    %105 = arith.maximumf %103, %104 : vector<8x128xf32>
    %106 = arith.truncf %105 : vector<8x128xf32> to vector<8x128xbf16>
    %c0_38 = arith.constant 0 : index
    %c0_39 = arith.constant 0 : index
    %107 = vector.load %arg13[%c0_38, %c0_39] : memref<128x2xbf16, #tpu.memory_space<vmem>>, vector<128x2xbf16>
    %cst_40 = arith.constant dense<0.000000e+00> : vector<8x2xf32>
    %108 = tpu.matmul %106, %107, %cst_40 {dimension_numbers = #tpu.dot_dimension_numbers<[1], [0], [0], [1], [0, 0, 1, 1], [], []>} : vector<8x128xbf16>, vector<128x2xbf16>, vector<8x2xf32> -> vector<8x2xf32>
    %c0_41 = arith.constant 0 : index
    %c0_42 = arith.constant 0 : index
    %109 = vector.load %arg14[%c0_41, %c0_42] : memref<1x2xf32, #tpu.memory_space<vmem>>, vector<1x2xf32>
    %110 = vector.broadcast %109 : vector<1x2xf32> to vector<8x2xf32>
    %111 = arith.addf %108, %110 : vector<8x2xf32>
    %c0_43 = arith.constant 0 : index
    %c0_44 = arith.constant 0 : index
    %112 = vector.load %arg15[%c0_43, %c0_44] : memref<8x2xf32, #tpu.memory_space<vmem>>, vector<8x2xf32>
    tpu.vector_store %arg15[%c0_43, %c0_44], %111 {strides = array<i32>} : memref<8x2xf32, #tpu.memory_space<vmem>>, vector<8x2xf32>,
    return
  }
  func.func @transform_0(%arg0: i32) -> (i32, i32) {
    %c0_i32 = arith.constant 0 : i32
    %c0_i32_0 = arith.constant 0 : i32
    return %arg0, %c0_i32 : i32, i32
  }
  func.func @transform_1(%arg0: i32) -> (i32, i32) {
    %c0_i32 = arith.constant 0 : i32
    %c0_i32_0 = arith.constant 0 : i32
    return %arg0, %c0_i32 : i32, i32
  }
  func.func @transform_2(%arg0: i32) -> (i32, i32) {
    %c0_i32 = arith.constant 0 : i32
    %c0_i32_0 = arith.constant 0 : i32
    %c0_i32_1 = arith.constant 0 : i32
    return %c0_i32, %c0_i32_0 : i32, i32
  }
  func.func @transform_3(%arg0: i32) -> (i32, i32) {
    %c0_i32 = arith.constant 0 : i32
    %c0_i32_0 = arith.constant 0 : i32
    %c0_i32_1 = arith.constant 0 : i32
    return %c0_i32, %c0_i32_0 : i32, i32
  }
  func.func @transform_4(%arg0: i32) -> (i32, i32) {
    %c0_i32 = arith.constant 0 : i32
    %c0_i32_0 = arith.constant 0 : i32
    %c0_i32_1 = arith.constant 0 : i32
    return %c0_i32, %c0_i32_0 : i32, i32
  }
  func.func @transform_5(%arg0: i32) -> (i32, i32) {
    %c0_i32 = arith.constant 0 : i32
    %c0_i32_0 = arith.constant 0 : i32
    %c0_i32_1 = arith.constant 0 : i32
    return %c0_i32, %c0_i32_0 : i32, i32
  }
  func.func @transform_6(%arg0: i32) -> (i32, i32) {
    %c0_i32 = arith.constant 0 : i32
    %c0_i32_0 = arith.constant 0 : i32
    %c0_i32_1 = arith.constant 0 : i32
    return %c0_i32, %c0_i32_0 : i32, i32
  }
  func.func @transform_7(%arg0: i32) -> (i32, i32) {
    %c0_i32 = arith.constant 0 : i32
    %c0_i32_0 = arith.constant 0 : i32
    %c0_i32_1 = arith.constant 0 : i32
    return %c0_i32, %c0_i32_0 : i32, i32
  }
  func.func @transform_8(%arg0: i32) -> (i32, i32) {
    %c0_i32 = arith.constant 0 : i32
    %c0_i32_0 = arith.constant 0 : i32
    %c0_i32_1 = arith.constant 0 : i32
    return %c0_i32, %c0_i32_0 : i32, i32
  }
  func.func @transform_9(%arg0: i32) -> (i32, i32) {
    %c0_i32 = arith.constant 0 : i32
    %c0_i32_0 = arith.constant 0 : i32
    %c0_i32_1 = arith.constant 0 : i32
    return %c0_i32, %c0_i32_0 : i32, i32
  }
  func.func @transform_10(%arg0: i32) -> (i32, i32) {
    %c0_i32 = arith.constant 0 : i32
    %c0_i32_0 = arith.constant 0 : i32
    %c0_i32_1 = arith.constant 0 : i32
    return %c0_i32, %c0_i32_0 : i32, i32
  }
  func.func @transform_11(%arg0: i32) -> (i32, i32) {
    %c0_i32 = arith.constant 0 : i32
    %c0_i32_0 = arith.constant 0 : i32
    %c0_i32_1 = arith.constant 0 : i32
    return %c0_i32, %c0_i32_0 : i32, i32
  }
  func.func @transform_12(%arg0: i32) -> (i32, i32) {
    %c0_i32 = arith.constant 0 : i32
    %c0_i32_0 = arith.constant 0 : i32
    %c0_i32_1 = arith.constant 0 : i32
    return %c0_i32, %c0_i32_0 : i32, i32
  }
  func.func @transform_13(%arg0: i32) -> (i32, i32) {
    %c0_i32 = arith.constant 0 : i32
    %c0_i32_0 = arith.constant 0 : i32
    %c0_i32_1 = arith.constant 0 : i32
    return %c0_i32, %c0_i32_0 : i32, i32
  }
  func.func @transform_14(%arg0: i32) -> (i32, i32) {
    %c0_i32 = arith.constant 0 : i32
    %c0_i32_0 = arith.constant 0 : i32
    return %arg0, %c0_i32 : i32, i32
  }
  func.func @transform_15(%arg0: i32) -> (i32, i32) {
    %c0_i32 = arith.constant 0 : i32
    %c0_i32_0 = arith.constant 0 : i32
    return %arg0, %c0_i32 : i32, i32
  }
}

</mosaic_0001>

<llo_original>
// kernel: tpu_custom_call.1
$region0: #{tpu_custom_call.1}
  #allocation0 [shape = 'u32[]', space=smem, size = 0x4, offset = 0x4, fixed_abs, tag = 'smem constant byte address 0x4 - core index']
  #allocation1 [shape = 'u32[144,128]{1,0:T(1,128)}', space=vmem, size = 0x12000, scoped, tag = 'internal scratch']
  %s0 = inlined_call_operand.hbm [shape: bf16[8,800], index: 0, kind: input, shape index: {}]
  %s1 = inlined_call_operand.vmem [shape: bf16[8,64], index: 1, kind: input, shape index: {}]
  %s2 = inlined_call_operand.hbm [shape: bf16[800,128], index: 2, kind: input, shape index: {}]
  %s3 = inlined_call_operand.vmem [shape: f32[3,128], index: 3, kind: input, shape index: {}]
  %s4 = inlined_call_operand.hbm [shape: bf16[64,128], index: 4, kind: input, shape index: {}]
  %s5 = inlined_call_operand.hbm [shape: f32[1,128], index: 5, kind: input, shape index: {}]
  %s6 = inlined_call_operand.vmem [shape: bf16[128,128], index: 6, kind: input, shape index: {}]
  %s7 = inlined_call_operand.hbm [shape: f32[1,128], index: 7, kind: input, shape index: {}]
  %s8 = inlined_call_operand.vmem [shape: f32[3,128], index: 8, kind: input, shape index: {}]
  %s9 = inlined_call_operand.vmem [shape: f32[1,3], index: 9, kind: input, shape index: {}]
  %s10 = inlined_call_operand.hbm [shape: bf16[128,128], index: 10, kind: input, shape index: {}]
  %s11 = inlined_call_operand.vmem [shape: f32[1,128], index: 11, kind: input, shape index: {}]
  %s12 = inlined_call_operand.vmem [shape: bf16[128,2], index: 12, kind: input, shape index: {}]
  %s13 = inlined_call_operand.vmem [shape: f32[1,2], index: 13, kind: input, shape index: {}]
  %s14 = inlined_call_operand.vmem [shape: f32[8,2], index: 14, kind: output, shape index: {0}]
  %s15 = inlined_call_operand.vmem [shape: f32[8,3], index: 15, kind: output, shape index: {1}]
  %16 = xla_tuple %s14, %s15
  %s17 = sld [smem:[#allocation0]]
  $region98: #{tpu_custom_call.1} parent=0
    _
  %s19 = ssub.s32 1, %s17
  %s20 = scalar_select 0, %s19, %s17
  $region1: #{tpu_custom_call.1} parent=0
    #allocation2 [shape = 'u8[14336]{0}', space=vmem, size = 0x3800, scoped, tag = 'input window, operand 0, single buffered']
    #allocation3 [shape = 's32[1]{0}', space=sflag, size = 0x4, scoped, tag = 'scoped memory for tpu_custom_call.1']
    #allocation4 [shape = 'u8[204800]{0}', space=vmem, size = 0x32000, scoped, tag = 'input window, operand 2, single buffered']
    #allocation5 [shape = 's32[1]{0}', space=sflag, size = 0x4, scoped, tag = 'scoped memory for tpu_custom_call.1']
    #allocation6 [shape = 'u8[16384]{0}', space=vmem, size = 0x4000, scoped, tag = 'input window, operand 4, single buffered']
    #allocation7 [shape = 'u8[512]{0}', space=vmem, size = 0x400, scoped, tag = 'input window, operand 5, single buffered']
    #allocation8 [shape = 's32[1]{0}', space=sflag, size = 0x4, scoped, tag = 'scoped memory for tpu_custom_call.1']
    #allocation9 [shape = 'u8[512]{0}', space=vmem, size = 0x400, scoped, tag = 'input window, operand 7, single buffered']
    #allocation10 [shape = 'u8[32768]{0}', space=vmem, size = 0x8000, scoped, tag = 'input window, operand 10, single buffered']
    #allocation11 [shape = 's32[1]{0}', space=sflag, size = 0x4, scoped, tag = 'scoped memory for tpu_custom_call.1']
    %21 = vsyncpa [#allocation3], 0
    %22 = vsyncpa [#allocation5], 0
    %23 = vsyncpa [#allocation8], 0
    %24 = vsyncpa [#allocation11], 0
    // Predicated region
    $region2: #{tpu_custom_call.1} parent=1 // pred_check
      _
    $region3: #{tpu_custom_call.1} parent=1 // pred_check_branch
      %26 = sbr.rel (0) target = $region5
    $region4: #{tpu_custom_call.1} parent=1 // pred_region
      %s28 = ssub.s32 448, 448
      %29 = vsyncadd [#allocation3], %s28
      %s31 = sshll.u32 [#allocation2], 4
      %s32 = int_to_ptr.vmem [resolvable:$true] %s31
      %34 = dma.hbm_to_vmem [thread:$0]  %s0, 448, %s32, [#allocation3]
    $region5: #{tpu_custom_call.1} parent=1 // pred_fallthru
      _
    // Predicated region
    $region6: #{tpu_custom_call.1} parent=1 // pred_check
      _
    $region7: #{tpu_custom_call.1} parent=1 // pred_check_branch
      %36 = sbr.rel (0) target = $region9
    $region8: #{tpu_custom_call.1} parent=1 // pred_region
      _
    $region9: #{tpu_custom_call.1} parent=1 // pred_fallthru
      _
    // Predicated region
    $region10: #{tpu_custom_call.1} parent=1 // pred_check
      _
    $region11: #{tpu_custom_call.1} parent=1 // pred_check_branch
      %38 = sbr.rel (0) target = $region13
    $region12: #{tpu_custom_call.1} parent=1 // pred_region
      %s40 = ssub.s32 6400, 6400
      %41 = vsyncadd [#allocation5], %s40
      %s42 = sshll.u32 [#allocation4], 4
      %s43 = int_to_ptr.vmem [resolvable:$true] %s42
      %48 = dma.hbm_to_vmem [thread:$0]  %s2, 6400, %s43, [#allocation5], 64, 64, 4
    $region13: #{tpu_custom_call.1} parent=1 // pred_fallthru
      _
    // Predicated region
    $region14: #{tpu_custom_call.1} parent=1 // pred_check
      _
    $region15: #{tpu_custom_call.1} parent=1 // pred_check_branch
      %50 = sbr.rel (0) target = $region17
    $region16: #{tpu_custom_call.1} parent=1 // pred_region
      _
    $region17: #{tpu_custom_call.1} parent=1 // pred_fallthru
      _
    // Predicated region
    $region18: #{tpu_custom_call.1} parent=1 // pred_check
      _
    $region19: #{tpu_custom_call.1} parent=1 // pred_check_branch
      %52 = sbr.rel (0) target = $region21
    $region20: #{tpu_custom_call.1} parent=1 // pred_region
      %s54 = ssub.s32 512, 512
      %55 = vsyncadd [#allocation5], %s54
      %s56 = sshll.u32 [#allocation6], 4
      %s57 = int_to_ptr.vmem [resolvable:$true] %s56
      %62 = dma.hbm_to_vmem [thread:$0]  %s4, 512, %s57, [#allocation5], 64, 64, 4
    $region21: #{tpu_custom_call.1} parent=1 // pred_fallthru
      _
    // Predicated region
    $region22: #{tpu_custom_call.1} parent=1 // pred_check
      _
    $region23: #{tpu_custom_call.1} parent=1 // pred_check_branch
      %64 = sbr.rel (0) target = $region25
    $region24: #{tpu_custom_call.1} parent=1 // pred_region
      %s66 = ssub.s32 16, 16
      %67 = vsyncadd [#allocation8], %s66
      %s69 = sshll.u32 [#allocation7], 4
      %s70 = int_to_ptr.vmem [resolvable:$true] %s69
      %72 = dma.hbm_to_vmem [thread:$0]  %s5, 16, %s70, [#allocation8]
    $region25: #{tpu_custom_call.1} parent=1 // pred_fallthru
      _
    // Predicated region
    $region26: #{tpu_custom_call.1} parent=1 // pred_check
      _
    $region27: #{tpu_custom_call.1} parent=1 // pred_check_branch
      %74 = sbr.rel (0) target = $region29
    $region28: #{tpu_custom_call.1} parent=1 // pred_region
      _
    $region29: #{tpu_custom_call.1} parent=1 // pred_fallthru
      _
    // Predicated region
    $region30: #{tpu_custom_call.1} parent=1 // pred_check
      _
    $region31: #{tpu_custom_call.1} parent=1 // pred_check_branch
      %76 = sbr.rel (0) target = $region33
    $region32: #{tpu_custom_call.1} parent=1 // pred_region
      %s78 = ssub.s32 16, 16
      %79 = vsyncadd [#allocation8], %s78
      %s81 = sshll.u32 [#allocation9], 4
      %s82 = int_to_ptr.vmem [resolvable:$true] %s81
      %84 = dma.hbm_to_vmem [thread:$0]  %s7, 16, %s82, [#allocation8]
    $region33: #{tpu_custom_call.1} parent=1 // pred_fallthru
      _
    // Predicated region
    $region34: #{tpu_custom_call.1} parent=1 // pred_check
      _
    $region35: #{tpu_custom_call.1} parent=1 // pred_check_branch
      %86 = sbr.rel (0) target = $region37
    $region36: #{tpu_custom_call.1} parent=1 // pred_region
      _
    $region37: #{tpu_custom_call.1} parent=1 // pred_fallthru
      _
    // Predicated region
    $region38: #{tpu_custom_call.1} parent=1 // pred_check
      _
    $region39: #{tpu_custom_call.1} parent=1 // pred_check_branch
      %88 = sbr.rel (0) target = $region41
    $region40: #{tpu_custom_call.1} parent=1 // pred_region
      _
    $region41: #{tpu_custom_call.1} parent=1 // pred_fallthru
      _
    // Predicated region
    $region42: #{tpu_custom_call.1} parent=1 // pred_check
      _
    $region43: #{tpu_custom_call.1} parent=1 // pred_check_branch
      %90 = sbr.rel (0) target = $region45
    $region44: #{tpu_custom_call.1} parent=1 // pred_region
      %s92 = ssub.s32 1024, 1024
      %93 = vsyncadd [#allocation11], %s92
      %s94 = sshll.u32 [#allocation10], 4
      %s95 = int_to_ptr.vmem [resolvable:$true] %s94
      %100 = dma.hbm_to_vmem [thread:$0]  %s10, 1024, %s95, [#allocation11], 64, 64, 4
    $region45: #{tpu_custom_call.1} parent=1 // pred_fallthru
      _
    // Predicated region
    $region46: #{tpu_custom_call.1} parent=1 // pred_check
      _
    $region47: #{tpu_custom_call.1} parent=1 // pred_check_branch
      %102 = sbr.rel (0) target = $region49
    $region48: #{tpu_custom_call.1} parent=1 // pred_region
      _
    $region49: #{tpu_custom_call.1} parent=1 // pred_fallthru
      _
    // Predicated region
    $region50: #{tpu_custom_call.1} parent=1 // pred_check
      _
    $region51: #{tpu_custom_call.1} parent=1 // pred_check_branch
      %104 = sbr.rel (0) target = $region53
    $region52: #{tpu_custom_call.1} parent=1 // pred_region
      _
    $region53: #{tpu_custom_call.1} parent=1 // pred_fallthru
      _
    // Predicated region
    $region54: #{tpu_custom_call.1} parent=1 // pred_check
      _
    $region55: #{tpu_custom_call.1} parent=1 // pred_check_branch
      %106 = sbr.rel (0) target = $region57
    $region56: #{tpu_custom_call.1} parent=1 // pred_region
      _
    $region57: #{tpu_custom_call.1} parent=1 // pred_fallthru
      _
    // Predicated region
    $region58: #{tpu_custom_call.1} parent=1 // pred_check
      _
    $region59: #{tpu_custom_call.1} parent=1 // pred_check_branch
      %108 = sbr.rel (0) target = $region61
    $region60: #{tpu_custom_call.1} parent=1 // pred_region
      %109 = dma.done [#allocation3], 448
    $region61: #{tpu_custom_call.1} parent=1 // pred_fallthru
      _
    // Predicated region
    $region62: #{tpu_custom_call.1} parent=1 // pred_check
      _
    $region63: #{tpu_custom_call.1} parent=1 // pred_check_branch
      %111 = sbr.rel (0) target = $region65
    $region64: #{tpu_custom_call.1} parent=1 // pred_region
      %112 = dma.done [#allocation5], 6400
    $region65: #{tpu_custom_call.1} parent=1 // pred_fallthru
      _
    // Predicated region
    $region66: #{tpu_custom_call.1} parent=1 // pred_check
      _
    $region67: #{tpu_custom_call.1} parent=1 // pred_check_branch
      %114 = sbr.rel (0) target = $region69
    $region68: #{tpu_custom_call.1} parent=1 // pred_region
      %115 = dma.done [#allocation5], 512
    $region69: #{tpu_custom_call.1} parent=1 // pred_fallthru
      _
    // Predicated region
    $region70: #{tpu_custom_call.1} parent=1 // pred_check
      _
    $region71: #{tpu_custom_call.1} parent=1 // pred_check_branch
      %117 = sbr.rel (0) target = $region73
    $region72: #{tpu_custom_call.1} parent=1 // pred_region
      %118 = dma.done [#allocation8], 16
    $region73: #{tpu_custom_call.1} parent=1 // pred_fallthru
      _
    // Predicated region
    $region74: #{tpu_custom_call.1} parent=1 // pred_check
      _
    $region75: #{tpu_custom_call.1} parent=1 // pred_check_branch
      %120 = sbr.rel (0) target = $region77
    $region76: #{tpu_custom_call.1} parent=1 // pred_region
      %121 = dma.done [#allocation8], 16
    $region77: #{tpu_custom_call.1} parent=1 // pred_fallthru
      _
    // Predicated region
    $region78: #{tpu_custom_call.1} parent=1 // pred_check
      _
    $region79: #{tpu_custom_call.1} parent=1 // pred_check_branch
      %123 = sbr.rel (0) target = $region81
    $region80: #{tpu_custom_call.1} parent=1 // pred_region
      %124 = dma.done [#allocation11], 1024
    $region81: #{tpu_custom_call.1} parent=1 // pred_fallthru
      _
    %v126 = vld [vmem:[%s1] sm:$0xf]
    %v127 = vld [vmem:[#allocation6] sm:$0xf]
    %v128 = vld [vmem:[#allocation6 + $0x4] sm:$0xf]
    %v129 = vld [vmem:[#allocation6 + $0x8] sm:$0xf]
    %v130 = vld [vmem:[#allocation6 + $0xc] sm:$0xf]
    %v131 = vld [vmem:[#allocation6 + $0x10] sm:$0xf]
    %v132 = vld [vmem:[#allocation6 + $0x14] sm:$0xf]
    %v133 = vld [vmem:[#allocation6 + $0x18] sm:$0xf]
    %v134 = vld [vmem:[#allocation6 + $0x1c] sm:$0xf]
    %v135 = vld [vmem:[#allocation7] sm:$0x1]
    %v137 = vlaneseq
    %v138 = vshrl.u32 %v137, 7
    %v139 = vsub.s32 0, %v138
    %v140 = vrot.slane %v135, %v139
    %v150 = vunpack.c.l.b16 %v127
    %v151 = vunpack.c.l.b16 %v128
    %v152 = vunpack.c.l.b16 %v129
    %v153 = vunpack.c.l.b16 %v130
    %v154 = vunpack.c.l.b16 %v131
    %v155 = vunpack.c.l.b16 %v132
    %v156 = vunpack.c.l.b16 %v133
    %v157 = vunpack.c.l.b16 %v134
    %v158 = vpack.c.b16 %v151, %v150
    %v159 = vpack.c.b16 %v153, %v152
    %v160 = vpack.c.b16 %v155, %v154
    %v161 = vpack.c.b16 %v157, %v156
    %vm166 = vcmask 523264
    %v168 = vsel %vm166, %v126, 0
    %170 = vmatprep.subr.bf16.mxu0 0
    %171 = vmatpush1.bf16.msra.mxu0 0
    %172 = vmatprep.subr.bf16.mxu0 0
    %173 = vmatpush1.bf16.msra.mxu0 0
    %174 = vmatprep.subr.bf16.mxu0 0
    %175 = vmatpush1.bf16.msra.mxu0 0
    %176 = vmatprep.subr.bf16.mxu0 0
    %177 = vmatpush1.bf16.msra.mxu0 0
    %178 = vmatprep.subr.bf16.mxu0 0
    %179 = vmatpush1.bf16.msra.mxu0 %v161
    %180 = vmatprep.subr.bf16.mxu0 0
    %181 = vmatpush1.bf16.msra.mxu0 %v160
    %182 = vmatprep.subr.bf16.mxu0 0
    %183 = vmatpush1.bf16.msra.mxu0 %v159
    %184 = vmatprep.subr.bf16.mxu0 0
    %185 = vmatpush1.bf16.msra.mxu0 %v158
    %186 = vmatprep.subr.bf16.mxu0 0
    %187 = vmatpush2.bf16.msra.mxu0 0
    %188 = vmatprep.subr.bf16.mxu0 0
    %189 = vmatpush2.bf16.msra.mxu0 0
    %190 = vmatprep.subr.bf16.mxu0 0
    %191 = vmatpush2.bf16.msra.mxu0 0
    %192 = vmatprep.subr.bf16.mxu0 0
    %193 = vmatpush2.bf16.msra.mxu0 0
    %194 = vmatprep.subr.bf16.mxu0 0
    %195 = vmatpush2.bf16.msra.mxu0 0
    %196 = vmatprep.subr.bf16.mxu0 0
    %197 = vmatpush2.bf16.msra.mxu0 0
    %198 = vmatprep.subr.bf16.mxu0 0
    %199 = vmatpush2.bf16.msra.mxu0 0
    %200 = vmatprep.subr.bf16.mxu0 0
    %201 = vmatpush2.bf16.msra.mxu0 0
    %202 = vmatprep.mubr.bf16.mxu0 0
    %203 = vmatmul.mubr.bf16.gmra.mxu0 %v168
    %v204 = vpop.f32.mrf.mxu0
    %v205 = vadd.f32 %v140, %v204
    %v206 = vpop.f32.mrf.mxu0
    %v207 = vpop.f32.mrf.mxu0
    %v208 = vpop.f32.mrf.mxu0
    %209 = vdwg.mxu0
    %v210 = vmax.f32 %v205, 0.0
    %v211 = vpack.c.bf16 %v210, %v210
    %v212 = vld [vmem:[%s6] sm:$0xf]
    %v213 = vld [vmem:[%s6 + $0x4] sm:$0xf]
    %v214 = vld [vmem:[%s6 + $0x8] sm:$0xf]
    %v215 = vld [vmem:[%s6 + $0xc] sm:$0xf]
    %v216 = vld [vmem:[%s6 + $0x10] sm:$0xf]
    %v217 = vld [vmem:[%s6 + $0x14] sm:$0xf]
    %v218 = vld [vmem:[%s6 + $0x18] sm:$0xf]
    %v219 = vld [vmem:[%s6 + $0x1c] sm:$0xf]
    %v220 = vld [vmem:[%s6 + $0x20] sm:$0xf]
    %v221 = vld [vmem:[%s6 + $0x24] sm:$0xf]
    %v222 = vld [vmem:[%s6 + $0x28] sm:$0xf]
    %v223 = vld [vmem:[%s6 + $0x2c] sm:$0xf]
    %v224 = vld [vmem:[%s6 + $0x30] sm:$0xf]
    %v225 = vld [vmem:[%s6 + $0x34] sm:$0xf]
    %v226 = vld [vmem:[%s6 + $0x38] sm:$0xf]
    %v227 = vld [vmem:[%s6 + $0x3c] sm:$0xf]
    %v228 = vld [vmem:[#allocation9] sm:$0x1]
    %v230 = vlaneseq
    %v231 = vshrl.u32 %v230, 7
    %v232 = vsub.s32 0, %v231
    %v233 = vrot.slane %v228, %v232
    %v251 = vunpack.c.l.b16 %v212
    %v252 = vunpack.c.l.b16 %v213
    %v253 = vunpack.c.l.b16 %v214
    %v254 = vunpack.c.l.b16 %v215
    %v255 = vunpack.c.l.b16 %v216
    %v256 = vunpack.c.l.b16 %v217
    %v257 = vunpack.c.l.b16 %v218
    %v258 = vunpack.c.l.b16 %v219
    %v259 = vunpack.c.l.b16 %v220
    %v260 = vunpack.c.l.b16 %v221
    %v261 = vunpack.c.l.b16 %v222
    %v262 = vunpack.c.l.b16 %v223
    %v263 = vunpack.c.l.b16 %v224
    %v264 = vunpack.c.l.b16 %v225
    %v265 = vunpack.c.l.b16 %v226
    %v266 = vunpack.c.l.b16 %v227
    %v267 = vpack.c.b16 %v252, %v251
    %v268 = vpack.c.b16 %v254, %v253
    %v269 = vpack.c.b16 %v256, %v255
    %v270 = vpack.c.b16 %v258, %v257
    %v271 = vpack.c.b16 %v260, %v259
    %v272 = vpack.c.b16 %v262, %v261
    %v273 = vpack.c.b16 %v264, %v263
    %v274 = vpack.c.b16 %v266, %v265
    %283 = vmatprep.subr.bf16.mxu0 0
    %284 = vmatpush1.bf16.msra.mxu0 %v274
    %285 = vmatprep.subr.bf16.mxu0 0
    %286 = vmatpush1.bf16.msra.mxu0 %v273
    %287 = vmatprep.subr.bf16.mxu0 0
    %288 = vmatpush1.bf16.msra.mxu0 %v272
    %289 = vmatprep.subr.bf16.mxu0 0
    %290 = vmatpush1.bf16.msra.mxu0 %v271
    %291 = vmatprep.subr.bf16.mxu0 0
    %292 = vmatpush1.bf16.msra.mxu0 %v270
    %293 = vmatprep.subr.bf16.mxu0 0
    %294 = vmatpush1.bf16.msra.mxu0 %v269
    %295 = vmatprep.subr.bf16.mxu0 0
    %296 = vmatpush1.bf16.msra.mxu0 %v268
    %297 = vmatprep.subr.bf16.mxu0 0
    %298 = vmatpush1.bf16.msra.mxu0 %v267
    %299 = vmatprep.subr.bf16.mxu0 0
    %300 = vmatpush2.bf16.msra.mxu0 0
    %301 = vmatprep.subr.bf16.mxu0 0
    %302 = vmatpush2.bf16.msra.mxu0 0
    %303 = vmatprep.subr.bf16.mxu0 0
    %304 = vmatpush2.bf16.msra.mxu0 0
    %305 = vmatprep.subr.bf16.mxu0 0
    %306 = vmatpush2.bf16.msra.mxu0 0
    %307 = vmatprep.subr.bf16.mxu0 0
    %308 = vmatpush2.bf16.msra.mxu0 0
    %309 = vmatprep.subr.bf16.mxu0 0
    %310 = vmatpush2.bf16.msra.mxu0 0
    %311 = vmatprep.subr.bf16.mxu0 0
    %312 = vmatpush2.bf16.msra.mxu0 0
    %313 = vmatprep.subr.bf16.mxu0 0
    %314 = vmatpush2.bf16.msra.mxu0 0
    %315 = vmatprep.mubr.bf16.mxu0 0
    %316 = vmatmul.mubr.bf16.gmra.mxu0 %v211
    %v317 = vpop.f32.mrf.mxu0
    %v318 = vadd.f32 %v233, %v317
    %v319 = vpop.f32.mrf.mxu0
    %v320 = vpop.f32.mrf.mxu0
    %v321 = vpop.f32.mrf.mxu0
    %322 = vdwg.mxu0
    %v323 = vmax.f32 %v318, 0.0
    %v324 = vld [vmem:[%s8] sm:$0x7]
    %v325 = vld [vmem:[%s9] sm:$0x1]
    %v326 = vlaneseq
    %v327 = vshrl.u32 %v326, 7
    %v328 = vsub.s32 0, %v327
    %v329 = vrot.slane %v324, %v328
    %v330 = vmul.f32 %v323, %v329
    %331 = vadd.xlane.f32.xlu0 %v330
    %v332 = vpop.xlane.xlu0 %331
    %v334 = vlaneseq
    %v335 = vshrl.u32 %v334, 7
    %v336 = vsub.s32 0, %v335
    %v337 = vrot.slane %v325, %v336
    %v339 = vadd.f32 %v332, %v337
    %v340 = vlaneseq
    %v341 = vshrl.u32 %v340, 7
    %v342 = vsub.s32 1, %v341
    %v343 = vrot.slane %v324, %v342
    %v344 = vmul.f32 %v323, %v343
    %345 = vadd.xlane.f32.xlu0 %v344
    %v346 = vpop.xlane.xlu0 %345
    %v347 = vadd.f32 %v346, %v337
    %v348 = vlaneseq
    %v349 = vshrl.u32 %v348, 7
    %v350 = vsub.s32 2, %v349
    %v351 = vrot.slane %v324, %v350
    %v352 = vmul.f32 %v323, %v351
    %353 = vadd.xlane.f32.xlu0 %v352
    %v354 = vpop.xlane.xlu0 %353
    %v355 = vadd.f32 %v354, %v337
    %357 = vrot.lane.b32.xlu0 %v347, 127
    %v358 = vpop.permute.xlu0 %357
    %v360 = vmax.f32 %v339, %v358
    %362 = vrot.lane.b32.xlu0 %v355, 126
    %v363 = vpop.permute.xlu0 %362
    %v365 = vmax.f32 %v360, %v363
    %v366 = vsub.f32 %v339, %v365
    %v367 = vmul.f32 %v366, 1.442695
    %v368 = vpow.pop %v367
    %370 = vrot.lane.b32.xlu0 %v365, 1
    %v371 = vpop.permute.xlu0 %370
    %v373 = vsub.f32 %v347, %v371
    %v374 = vmul.f32 %v373, 1.442695
    %v375 = vpow.pop %v374
    %376 = vrot.lane.b32.xlu0 %v365, 2
    %v377 = vpop.permute.xlu0 %376
    %v379 = vsub.f32 %v355, %v377
    %v380 = vmul.f32 %v379, 1.442695
    %v381 = vpow.pop %v380
    %v382 = vadd.f32 %v368, 0.0
    %384 = vrot.lane.b32.xlu0 %v375, 127
    %v385 = vpop.permute.xlu0 %384
    %v387 = vadd.f32 %v382, %v385
    %389 = vrot.lane.b32.xlu0 %v381, 126
    %v390 = vpop.permute.xlu0 %389
    %v392 = vadd.f32 %v387, %v390
    %v393 = vrcp.pop %v392
    %v394 = vmul.f32 %v368, %v393
    %396 = vrot.lane.b32.xlu0 %v393, 1
    %v397 = vpop.permute.xlu0 %396
    %v399 = vmul.f32 %v375, %v397
    %400 = vrot.lane.b32.xlu0 %v393, 2
    %v401 = vpop.permute.xlu0 %400
    %v403 = vmul.f32 %v381, %v401
    %vm404 = vcmask 7168
    %405 = vst.msk [vmem:[%s15] sm:$0xff] %vm404, %v394
    %vm406 = vcmask 15368
    %407 = vst.msk [vmem:[%s15] sm:$0xff] %vm406, %v399
    %vm408 = vcmask 23568
    %409 = vst.msk [vmem:[%s15] sm:$0xff] %vm408, %v403
    %v410 = vlaneseq
    %v411 = vand.u32 %v410, 127
    %v412 = vadd.s32 %v411, 128
    %v413 = vadd.s32 %v411, 256
    %v414 = vadd.s32 %v411, 384
    %v415 = vadd.s32 %v411, 512
    %v416 = vadd.s32 %v411, 640
    %v417 = vadd.s32 %v411, 768
    %vm418 = vcmp.lt.s32.totalorder %v411, 544
    %vm419 = vcmp.lt.s32.totalorder %v412, 544
    %vm420 = vcmp.lt.s32.totalorder %v413, 544
    %vm421 = vcmp.lt.s32.totalorder %v414, 544
    %vm422 = vcmp.lt.s32.totalorder %v415, 544
    %vm423 = vcmp.lt.s32.totalorder %v416, 544
    %vm424 = vcmp.lt.s32.totalorder %v417, 544
    %426 = vset.pattern.permute.xlu0 1
    %427 = vperm.xlu0 %426, %v399
    %v428 = vpop.permute.xlu0 %427
    %431 = vset.pattern.permute.xlu0 2
    %432 = vperm.xlu0 %431, %v403
    %v433 = vpop.permute.xlu0 %432
    %v435 = vsel %vm418, %v428, %v433
    %v436 = vsel %vm419, %v428, %v433
    %v437 = vsel %vm420, %v428, %v433
    %v438 = vsel %vm421, %v428, %v433
    %v439 = vsel %vm422, %v428, %v433
    %v440 = vsel %vm423, %v428, %v433
    %v441 = vsel %vm424, %v428, %v433
    %vm442 = vcmp.lt.s32.totalorder %v411, 512
    %vm443 = vcmp.lt.s32.totalorder %v412, 512
    %vm444 = vcmp.lt.s32.totalorder %v413, 512
    %vm445 = vcmp.lt.s32.totalorder %v414, 512
    %vm446 = vcmp.lt.s32.totalorder %v415, 512
    %vm447 = vcmp.lt.s32.totalorder %v416, 512
    %vm448 = vcmp.lt.s32.totalorder %v417, 512
    %450 = vset.pattern.permute.xlu0 0
    %451 = vperm.xlu0 %450, %v394
    %v452 = vpop.permute.xlu0 %451
    %v454 = vsel %vm442, %v452, %v435
    %v455 = vsel %vm443, %v452, %v436
    %v456 = vsel %vm444, %v452, %v437
    %v457 = vsel %vm445, %v452, %v438
    %v458 = vsel %vm446, %v452, %v439
    %v459 = vsel %vm447, %v452, %v440
    %v460 = vsel %vm448, %v452, %v441
    %v461 = vld [vmem:[#allocation2] sm:$0xff]
    %v462 = vld [vmem:[#allocation2 + $0x8] sm:$0xff]
    %v463 = vld [vmem:[#allocation2 + $0x10] sm:$0xff]
    %v464 = vld [vmem:[#allocation2 + $0x18] sm:$0xf]
    %v465 = vunpack.c.l.bf16 %v461
    %v466 = vunpack.c.h.bf16 %v461
    %v467 = vunpack.c.l.bf16 %v462
    %v468 = vunpack.c.h.bf16 %v462
    %v469 = vunpack.c.l.bf16 %v463
    %v470 = vunpack.c.h.bf16 %v463
    %v471 = vunpack.c.l.bf16 %v464
    %v472 = vmul.f32 %v465, %v454
    %v473 = vmul.f32 %v466, %v455
    %v474 = vmul.f32 %v467, %v456
    %v475 = vmul.f32 %v468, %v457
    %v476 = vmul.f32 %v469, %v458
    %v477 = vmul.f32 %v470, %v459
    %v478 = vmul.f32 %v471, %v460
    %v479 = vpack.c.bf16 %v472, %v472
    %v480 = vpack.c.bf16 %v473, %v473
    %v481 = vpack.c.bf16 %v474, %v474
    %v482 = vpack.c.bf16 %v475, %v475
    %v483 = vpack.c.bf16 %v476, %v476
    %v484 = vpack.c.bf16 %v477, %v477
    %v485 = vpack.c.bf16 %v478, %v478
    %v486 = vld [vmem:[%s3] sm:$0x7]
    %v487 = vlaneseq
    %v488 = vshrl.u32 %v487, 7
    %v489 = vsub.s32 0, %v488
    %v490 = vrot.slane %v486, %v489
    %v491 = vmul.f32 %v452, %v490
    %v492 = vadd.f32 %v491, 0.0
    %v493 = vlaneseq
    %v494 = vshrl.u32 %v493, 7
    %v495 = vsub.s32 1, %v494
    %v496 = vrot.slane %v486, %v495
    %v497 = vmul.f32 %v428, %v496
    %v498 = vadd.f32 %v492, %v497
    %v499 = vlaneseq
    %v500 = vshrl.u32 %v499, 7
    %v501 = vsub.s32 2, %v500
    %v502 = vrot.slane %v486, %v501
    %v503 = vmul.f32 %v433, %v502
    %v504 = vadd.f32 %v498, %v503
    %v505 = vld [vmem:[#allocation4] sm:$0xf]
    %v506 = vld [vmem:[#allocation4 + $0x4] sm:$0xf]
    %v507 = vld [vmem:[#allocation4 + $0x8] sm:$0xf]
    %v508 = vld [vmem:[#allocation4 + $0xc] sm:$0xf]
    %v509 = vld [vmem:[#allocation4 + $0x10] sm:$0xf]
    %v510 = vld [vmem:[#allocation4 + $0x14] sm:$0xf]
    %v511 = vld [vmem:[#allocation4 + $0x18] sm:$0xf]
    %v512 = vld [vmem:[#allocation4 + $0x1c] sm:$0xf]
    %v513 = vld [vmem:[#allocation4 + $0x20] sm:$0xf]
    %v514 = vld [vmem:[#allocation4 + $0x24] sm:$0xf]
    %v515 = vld [vmem:[#allocation4 + $0x28] sm:$0xf]
    %v516 = vld [vmem:[#allocation4 + $0x2c] sm:$0xf]
    %v517 = vld [vmem:[#allocation4 + $0x30] sm:$0xf]
    %v518 = vld [vmem:[#allocation4 + $0x34] sm:$0xf]
    %v519 = vld [vmem:[#allocation4 + $0x38] sm:$0xf]
    %v520 = vld [vmem:[#allocation4 + $0x3c] sm:$0xf]
    %v521 = vld [vmem:[#allocation4 + $0x40] sm:$0xf]
    %v522 = vld [vmem:[#allocation4 + $0x44] sm:$0xf]
    %v523 = vld [vmem:[#allocation4 + $0x48] sm:$0xf]
    %v524 = vld [vmem:[#allocation4 + $0x4c] sm:$0xf]
    %v525 = vld [vmem:[#allocation4 + $0x50] sm:$0xf]
    %v526 = vld [vmem:[#allocation4 + $0x54] sm:$0xf]
    %v527 = vld [vmem:[#allocation4 + $0x58] sm:$0xf]
    %v528 = vld [vmem:[#allocation4 + $0x5c] sm:$0xf]
    %v529 = vld [vmem:[#allocation4 + $0x60] sm:$0xf]
    %v530 = vld [vmem:[#allocation4 + $0x64] sm:$0xf]
    %v531 = vld [vmem:[#allocation4 + $0x68] sm:$0xf]
    %v532 = vld [vmem:[#allocation4 + $0x6c] sm:$0xf]
    %v533 = vld [vmem:[#allocation4 + $0x70] sm:$0xf]
    %v534 = vld [vmem:[#allocation4 + $0x74] sm:$0xf]
    %v535 = vld [vmem:[#allocation4 + $0x78] sm:$0xf]
    %v536 = vld [vmem:[#allocation4 + $0x7c] sm:$0xf]
    %v537 = vld [vmem:[#allocation4 + $0x80] sm:$0xf]
    %v538 = vld [vmem:[#allocation4 + $0x84] sm:$0xf]
    %v539 = vld [vmem:[#allocation4 + $0x88] sm:$0xf]
    %v540 = vld [vmem:[#allocation4 + $0x8c] sm:$0xf]
    %v541 = vld [vmem:[#allocation4 + $0x90] sm:$0xf]
    %v542 = vld [vmem:[#allocation4 + $0x94] sm:$0xf]
    %v543 = vld [vmem:[#allocation4 + $0x98] sm:$0xf]
    %v544 = vld [vmem:[#allocation4 + $0x9c] sm:$0xf]
    %v545 = vld [vmem:[#allocation4 + $0xa0] sm:$0xf]
    %v546 = vld [vmem:[#allocation4 + $0xa4] sm:$0xf]
    %v547 = vld [vmem:[#allocation4 + $0xa8] sm:$0xf]
    %v548 = vld [vmem:[#allocation4 + $0xac] sm:$0xf]
    %v549 = vld [vmem:[#allocation4 + $0xb0] sm:$0xf]
    %v550 = vld [vmem:[#allocation4 + $0xb4] sm:$0xf]
    %v551 = vld [vmem:[#allocation4 + $0xb8] sm:$0xf]
    %v552 = vld [vmem:[#allocation4 + $0xbc] sm:$0xf]
    %v553 = vld [vmem:[#allocation4 + $0xc0] sm:$0xf]
    %v554 = vld [vmem:[#allocation4 + $0xc4] sm:$0xf]
    %v555 = vld [vmem:[#allocation4 + $0xc8] sm:$0xf]
    %v556 = vld [vmem:[#allocation4 + $0xcc] sm:$0xf]
    %v557 = vld [vmem:[#allocation4 + $0xd0] sm:$0xf]
    %v558 = vld [vmem:[#allocation4 + $0xd4] sm:$0xf]
    %v559 = vld [vmem:[#allocation4 + $0xd8] sm:$0xf]
    %v560 = vld [vmem:[#allocation4 + $0xdc] sm:$0xf]
    %v561 = vld [vmem:[#allocation4 + $0xe0] sm:$0xf]
    %v562 = vld [vmem:[#allocation4 + $0xe4] sm:$0xf]
    %v563 = vld [vmem:[#allocation4 + $0xe8] sm:$0xf]
    %v564 = vld [vmem:[#allocation4 + $0xec] sm:$0xf]
    %v565 = vld [vmem:[#allocation4 + $0xf0] sm:$0xf]
    %v566 = vld [vmem:[#allocation4 + $0xf4] sm:$0xf]
    %v567 = vld [vmem:[#allocation4 + $0xf8] sm:$0xf]
    %v568 = vld [vmem:[#allocation4 + $0xfc] sm:$0xf]
    %v569 = vld [vmem:[#allocation4 + $0x100] sm:$0xf]
    %v570 = vld [vmem:[#allocation4 + $0x104] sm:$0xf]
    %v571 = vld [vmem:[#allocation4 + $0x108] sm:$0xf]
    %v572 = vld [vmem:[#allocation4 + $0x10c] sm:$0xf]
    %v573 = vld [vmem:[#allocation4 + $0x110] sm:$0xf]
    %v574 = vld [vmem:[#allocation4 + $0x114] sm:$0xf]
    %v575 = vld [vmem:[#allocation4 + $0x118] sm:$0xf]
    %v576 = vld [vmem:[#allocation4 + $0x11c] sm:$0xf]
    %v577 = vld [vmem:[#allocation4 + $0x120] sm:$0xf]
    %v578 = vld [vmem:[#allocation4 + $0x124] sm:$0xf]
    %v579 = vld [vmem:[#allocation4 + $0x128] sm:$0xf]
    %v580 = vld [vmem:[#allocation4 + $0x12c] sm:$0xf]
    %v581 = vld [vmem:[#allocation4 + $0x130] sm:$0xf]
    %v582 = vld [vmem:[#allocation4 + $0x134] sm:$0xf]
    %v583 = vld [vmem:[#allocation4 + $0x138] sm:$0xf]
    %v584 = vld [vmem:[#allocation4 + $0x13c] sm:$0xf]
    %v585 = vld [vmem:[#allocation4 + $0x140] sm:$0xf]
    %v586 = vld [vmem:[#allocation4 + $0x144] sm:$0xf]
    %v587 = vld [vmem:[#allocation4 + $0x148] sm:$0xf]
    %v588 = vld [vmem:[#allocation4 + $0x14c] sm:$0xf]
    %v589 = vld [vmem:[#allocation4 + $0x150] sm:$0xf]
    %v590 = vld [vmem:[#allocation4 + $0x154] sm:$0xf]
    %v591 = vld [vmem:[#allocation4 + $0x158] sm:$0xf]
    %v592 = vld [vmem:[#allocation4 + $0x15c] sm:$0xf]
    %v593 = vld [vmem:[#allocation4 + $0x160] sm:$0xf]
    %v594 = vld [vmem:[#allocation4 + $0x164] sm:$0xf]
    %v595 = vld [vmem:[#allocation4 + $0x168] sm:$0xf]
    %v596 = vld [vmem:[#allocation4 + $0x16c] sm:$0xf]
    %v597 = vld [vmem:[#allocation4 + $0x170] sm:$0xf]
    %v598 = vld [vmem:[#allocation4 + $0x174] sm:$0xf]
    %v599 = vld [vmem:[#allocation4 + $0x178] sm:$0xf]
    %v600 = vld [vmem:[#allocation4 + $0x17c] sm:$0xf]
    %v601 = vld [vmem:[#allocation4 + $0x180] sm:$0xf]
    %v602 = vld [vmem:[#allocation4 + $0x184] sm:$0xf]
    %v603 = vld [vmem:[#allocation4 + $0x188] sm:$0xf]
    %v604 = vld [vmem:[#allocation4 + $0x18c] sm:$0xf]
    %v705 = vunpack.c.l.b16 %v505
    %v706 = vunpack.c.l.b16 %v506
    %v707 = vunpack.c.l.b16 %v507
    %v708 = vunpack.c.l.b16 %v508
    %v709 = vunpack.c.l.b16 %v509
    %v710 = vunpack.c.l.b16 %v510
    %v711 = vunpack.c.l.b16 %v511
    %v712 = vunpack.c.l.b16 %v512
    %v713 = vunpack.c.l.b16 %v513
    %v714 = vunpack.c.l.b16 %v514
    %v715 = vunpack.c.l.b16 %v515
    %v716 = vunpack.c.l.b16 %v516
    %v717 = vunpack.c.l.b16 %v517
    %v718 = vunpack.c.l.b16 %v518
    %v719 = vunpack.c.l.b16 %v519
    %v720 = vunpack.c.l.b16 %v520
    %v721 = vunpack.c.l.b16 %v521
    %v722 = vunpack.c.l.b16 %v522
    %v723 = vunpack.c.l.b16 %v523
    %v724 = vunpack.c.l.b16 %v524
    %v725 = vunpack.c.l.b16 %v525
    %v726 = vunpack.c.l.b16 %v526
    %v727 = vunpack.c.l.b16 %v527
    %v728 = vunpack.c.l.b16 %v528
    %v729 = vunpack.c.l.b16 %v529
    %v730 = vunpack.c.l.b16 %v530
    %v731 = vunpack.c.l.b16 %v531
    %v732 = vunpack.c.l.b16 %v532
    %v733 = vunpack.c.l.b16 %v533
    %v734 = vunpack.c.l.b16 %v534
    %v735 = vunpack.c.l.b16 %v535
    %v736 = vunpack.c.l.b16 %v536
    %v737 = vunpack.c.l.b16 %v537
    %v738 = vunpack.c.l.b16 %v538
    %v739 = vunpack.c.l.b16 %v539
    %v740 = vunpack.c.l.b16 %v540
    %v741 = vunpack.c.l.b16 %v541
    %v742 = vunpack.c.l.b16 %v542
    %v743 = vunpack.c.l.b16 %v543
    %v744 = vunpack.c.l.b16 %v544
    %v745 = vunpack.c.l.b16 %v545
    %v746 = vunpack.c.l.b16 %v546
    %v747 = vunpack.c.l.b16 %v547
    %v748 = vunpack.c.l.b16 %v548
    %v749 = vunpack.c.l.b16 %v549
    %v750 = vunpack.c.l.b16 %v550
    %v751 = vunpack.c.l.b16 %v551
    %v752 = vunpack.c.l.b16 %v552
    %v753 = vunpack.c.l.b16 %v553
    %v754 = vunpack.c.l.b16 %v554
    %v755 = vunpack.c.l.b16 %v555
    %v756 = vunpack.c.l.b16 %v556
    %v757 = vunpack.c.l.b16 %v557
    %v758 = vunpack.c.l.b16 %v558
    %v759 = vunpack.c.l.b16 %v559
    %v760 = vunpack.c.l.b16 %v560
    %v761 = vunpack.c.l.b16 %v561
    %v762 = vunpack.c.l.b16 %v562
    %v763 = vunpack.c.l.b16 %v563
    %v764 = vunpack.c.l.b16 %v564
    %v765 = vunpack.c.l.b16 %v565
    %v766 = vunpack.c.l.b16 %v566
    %v767 = vunpack.c.l.b16 %v567
    %v768 = vunpack.c.l.b16 %v568
    %v769 = vunpack.c.l.b16 %v569
    %v770 = vunpack.c.l.b16 %v570
    %v771 = vunpack.c.l.b16 %v571
    %v772 = vunpack.c.l.b16 %v572
    %v773 = vunpack.c.l.b16 %v573
    %v774 = vunpack.c.l.b16 %v574
    %v775 = vunpack.c.l.b16 %v575
    %v776 = vunpack.c.l.b16 %v576
    %v777 = vunpack.c.l.b16 %v577
    %v778 = vunpack.c.l.b16 %v578
    %v779 = vunpack.c.l.b16 %v579
    %v780 = vunpack.c.l.b16 %v580
    %v781 = vunpack.c.l.b16 %v581
    %v782 = vunpack.c.l.b16 %v582
    %v783 = vunpack.c.l.b16 %v583
    %v784 = vunpack.c.l.b16 %v584
    %v785 = vunpack.c.l.b16 %v585
    %v786 = vunpack.c.l.b16 %v586
    %v787 = vunpack.c.l.b16 %v587
    %v788 = vunpack.c.l.b16 %v588
    %v789 = vunpack.c.l.b16 %v589
    %v790 = vunpack.c.l.b16 %v590
    %v791 = vunpack.c.l.b16 %v591
    %v792 = vunpack.c.l.b16 %v592
    %v793 = vunpack.c.l.b16 %v593
    %v794 = vunpack.c.l.b16 %v594
    %v795 = vunpack.c.l.b16 %v595
    %v796 = vunpack.c.l.b16 %v596
    %v797 = vunpack.c.l.b16 %v597
    %v798 = vunpack.c.l.b16 %v598
    %v799 = vunpack.c.l.b16 %v599
    %v800 = vunpack.c.l.b16 %v600
    %v801 = vunpack.c.l.b16 %v601
    %v802 = vunpack.c.l.b16 %v602
    %v803 = vunpack.c.l.b16 %v603
    %v804 = vunpack.c.l.b16 %v604
    %v805 = vpack.c.b16 %v706, %v705
    %v806 = vpack.c.b16 %v708, %v707
    %v807 = vpack.c.b16 %v710, %v709
    %v808 = vpack.c.b16 %v712, %v711
    %v809 = vpack.c.b16 %v714, %v713
    %v810 = vpack.c.b16 %v716, %v715
    %v811 = vpack.c.b16 %v718, %v717
    %v812 = vpack.c.b16 %v720, %v719
    %v813 = vpack.c.b16 %v722, %v721
    %v814 = vpack.c.b16 %v724, %v723
    %v815 = vpack.c.b16 %v726, %v725
    %v816 = vpack.c.b16 %v728, %v727
    %v817 = vpack.c.b16 %v730, %v729
    %v818 = vpack.c.b16 %v732, %v731
    %v819 = vpack.c.b16 %v734, %v733
    %v820 = vpack.c.b16 %v736, %v735
    %v821 = vpack.c.b16 %v738, %v737
    %v822 = vpack.c.b16 %v740, %v739
    %v823 = vpack.c.b16 %v742, %v741
    %v824 = vpack.c.b16 %v744, %v743
    %v825 = vpack.c.b16 %v746, %v745
    %v826 = vpack.c.b16 %v748, %v747
    %v827 = vpack.c.b16 %v750, %v749
    %v828 = vpack.c.b16 %v752, %v751
    %v829 = vpack.c.b16 %v754, %v753
    %v830 = vpack.c.b16 %v756, %v755
    %v831 = vpack.c.b16 %v758, %v757
    %v832 = vpack.c.b16 %v760, %v759
    %v833 = vpack.c.b16 %v762, %v761
    %v834 = vpack.c.b16 %v764, %v763
    %v835 = vpack.c.b16 %v766, %v765
    %v836 = vpack.c.b16 %v768, %v767
    %v837 = vpack.c.b16 %v770, %v769
    %v838 = vpack.c.b16 %v772, %v771
    %v839 = vpack.c.b16 %v774, %v773
    %v840 = vpack.c.b16 %v776, %v775
    %v841 = vpack.c.b16 %v778, %v777
    %v842 = vpack.c.b16 %v780, %v779
    %v843 = vpack.c.b16 %v782, %v781
    %v844 = vpack.c.b16 %v784, %v783
    %v845 = vpack.c.b16 %v786, %v785
    %v846 = vpack.c.b16 %v788, %v787
    %v847 = vpack.c.b16 %v790, %v789
    %v848 = vpack.c.b16 %v792, %v791
    %v849 = vpack.c.b16 %v794, %v793
    %v850 = vpack.c.b16 %v796, %v795
    %v851 = vpack.c.b16 %v798, %v797
    %v852 = vpack.c.b16 %v800, %v799
    %v853 = vpack.c.b16 %v802, %v801
    %v854 = vpack.c.b16 %v804, %v803
    %vm905 = vcmask 261120
    %v907 = vsel %vm905, %v485, 0
    %909 = vmatprep.subr.bf16.mxu0 0
    %910 = vmatpush1.bf16.msra.mxu0 %v812
    %911 = vmatprep.subr.bf16.mxu0 0
    %912 = vmatpush1.bf16.msra.mxu0 %v811
    %913 = vmatprep.subr.bf16.mxu0 0
    %914 = vmatpush1.bf16.msra.mxu0 %v810
    %915 = vmatprep.subr.bf16.mxu0 0
    %916 = vmatpush1.bf16.msra.mxu0 %v809
    %917 = vmatprep.subr.bf16.mxu0 0
    %918 = vmatpush1.bf16.msra.mxu0 %v808
    %919 = vmatprep.subr.bf16.mxu0 0
    %920 = vmatpush1.bf16.msra.mxu0 %v807
    %921 = vmatprep.subr.bf16.mxu0 0
    %922 = vmatpush1.bf16.msra.mxu0 %v806
    %923 = vmatprep.subr.bf16.mxu0 0
    %924 = vmatpush1.bf16.msra.mxu0 %v805
    %925 = vmatprep.subr.bf16.mxu0 0
    %926 = vmatpush2.bf16.msra.mxu0 %v820
    %927 = vmatprep.subr.bf16.mxu0 0
    %928 = vmatpush2.bf16.msra.mxu0 %v819
    %929 = vmatprep.subr.bf16.mxu0 0
    %930 = vmatpush2.bf16.msra.mxu0 %v818
    %931 = vmatprep.subr.bf16.mxu0 0
    %932 = vmatpush2.bf16.msra.mxu0 %v817
    %933 = vmatprep.subr.bf16.mxu0 0
    %934 = vmatpush2.bf16.msra.mxu0 %v816
    %935 = vmatprep.subr.bf16.mxu0 0
    %936 = vmatpush2.bf16.msra.mxu0 %v815
    %937 = vmatprep.subr.bf16.mxu0 0
    %938 = vmatpush2.bf16.msra.mxu0 %v814
    %939 = vmatprep.subr.bf16.mxu0 0
    %940 = vmatpush2.bf16.msra.mxu0 %v813
    %941 = vmatprep.mubr.bf16.mxu0 %v480
    %942 = vmatmul.mubr.bf16.gmra.mxu0 %v479
    %v943 = vpop.f32.mrf.mxu0
    %v944 = vadd.f32 %v504, %v943
    %v945 = vpop.f32.mrf.mxu0
    %v946 = vpop.f32.mrf.mxu0
    %v947 = vpop.f32.mrf.mxu0
    %948 = vdwg.mxu0
    %949 = vmatprep.subr.bf16.mxu0 0
    %950 = vmatpush1.bf16.msra.mxu0 %v828
    %951 = vmatprep.subr.bf16.mxu0 0
    %952 = vmatpush1.bf16.msra.mxu0 %v827
    %953 = vmatprep.subr.bf16.mxu0 0
    %954 = vmatpush1.bf16.msra.mxu0 %v826
    %955 = vmatprep.subr.bf16.mxu0 0
    %956 = vmatpush1.bf16.msra.mxu0 %v825
    %957 = vmatprep.subr.bf16.mxu0 0
    %958 = vmatpush1.bf16.msra.mxu0 %v824
    %959 = vmatprep.subr.bf16.mxu0 0
    %960 = vmatpush1.bf16.msra.mxu0 %v823
    %961 = vmatprep.subr.bf16.mxu0 0
    %962 = vmatpush1.bf16.msra.mxu0 %v822
    %963 = vmatprep.subr.bf16.mxu0 0
    %964 = vmatpush1.bf16.msra.mxu0 %v821
    %965 = vmatprep.subr.bf16.mxu0 0
    %966 = vmatpush2.bf16.msra.mxu0 %v836
    %967 = vmatprep.subr.bf16.mxu0 0
    %968 = vmatpush2.bf16.msra.mxu0 %v835
    %969 = vmatprep.subr.bf16.mxu0 0
    %970 = vmatpush2.bf16.msra.mxu0 %v834
    %971 = vmatprep.subr.bf16.mxu0 0
    %972 = vmatpush2.bf16.msra.mxu0 %v833
    %973 = vmatprep.subr.bf16.mxu0 0
    %974 = vmatpush2.bf16.msra.mxu0 %v832
    %975 = vmatprep.subr.bf16.mxu0 0
    %976 = vmatpush2.bf16.msra.mxu0 %v831
    %977 = vmatprep.subr.bf16.mxu0 0
    %978 = vmatpush2.bf16.msra.mxu0 %v830
    %979 = vmatprep.subr.bf16.mxu0 0
    %980 = vmatpush2.bf16.msra.mxu0 %v829
    %981 = vmatprep.mubr.bf16.mxu0 %v482
    %982 = vmatmul.mubr.bf16.gmra.mxu0 %v481
    %v983 = vpop.f32.mrf.mxu0
    %v984 = vadd.f32 %v944, %v983
    %v985 = vpop.f32.mrf.mxu0
    %v986 = vpop.f32.mrf.mxu0
    %v987 = vpop.f32.mrf.mxu0
    %988 = vdwg.mxu0
    %989 = vmatprep.subr.bf16.mxu0 0
    %990 = vmatpush1.bf16.msra.mxu0 %v844
    %991 = vmatprep.subr.bf16.mxu0 0
    %992 = vmatpush1.bf16.msra.mxu0 %v843
    %993 = vmatprep.subr.bf16.mxu0 0
    %994 = vmatpush1.bf16.msra.mxu0 %v842
    %995 = vmatprep.subr.bf16.mxu0 0
    %996 = vmatpush1.bf16.msra.mxu0 %v841
    %997 = vmatprep.subr.bf16.mxu0 0
    %998 = vmatpush1.bf16.msra.mxu0 %v840
    %999 = vmatprep.subr.bf16.mxu0 0
    %1000 = vmatpush1.bf16.msra.mxu0 %v839
    %1001 = vmatprep.subr.bf16.mxu0 0
    %1002 = vmatpush1.bf16.msra.mxu0 %v838
    %1003 = vmatprep.subr.bf16.mxu0 0
    %1004 = vmatpush1.bf16.msra.mxu0 %v837
    %1005 = vmatprep.subr.bf16.mxu0 0
    %1006 = vmatpush2.bf16.msra.mxu0 %v852
    %1007 = vmatprep.subr.bf16.mxu0 0
    %1008 = vmatpush2.bf16.msra.mxu0 %v851
    %1009 = vmatprep.subr.bf16.mxu0 0
    %1010 = vmatpush2.bf16.msra.mxu0 %v850
    %1011 = vmatprep.subr.bf16.mxu0 0
    %1012 = vmatpush2.bf16.msra.mxu0 %v849
    %1013 = vmatprep.subr.bf16.mxu0 0
    %1014 = vmatpush2.bf16.msra.mxu0 %v848
    %1015 = vmatprep.subr.bf16.mxu0 0
    %1016 = vmatpush2.bf16.msra.mxu0 %v847
    %1017 = vmatprep.subr.bf16.mxu0 0
    %1018 = vmatpush2.bf16.msra.mxu0 %v846
    %1019 = vmatprep.subr.bf16.mxu0 0
    %1020 = vmatpush2.bf16.msra.mxu0 %v845
    %1021 = vmatprep.mubr.bf16.mxu0 %v484
    %1022 = vmatmul.mubr.bf16.gmra.mxu0 %v483
    %v1023 = vpop.f32.mrf.mxu0
    %v1024 = vadd.f32 %v984, %v1023
    %v1025 = vpop.f32.mrf.mxu0
    %v1026 = vpop.f32.mrf.mxu0
    %v1027 = vpop.f32.mrf.mxu0
    %1028 = vdwg.mxu0
    %1029 = vmatprep.subr.bf16.mxu0 0
    %1030 = vmatpush1.bf16.msra.mxu0 0
    %1031 = vmatprep.subr.bf16.mxu0 0
    %1032 = vmatpush1.bf16.msra.mxu0 0
    %1033 = vmatprep.subr.bf16.mxu0 0
    %1034 = vmatpush1.bf16.msra.mxu0 0
    %1035 = vmatprep.subr.bf16.mxu0 0
    %1036 = vmatpush1.bf16.msra.mxu0 0
    %1037 = vmatprep.subr.bf16.mxu0 0
    %1038 = vmatpush1.bf16.msra.mxu0 0
    %1039 = vmatprep.subr.bf16.mxu0 0
    %1040 = vmatpush1.bf16.msra.mxu0 0
    %1041 = vmatprep.subr.bf16.mxu0 0
    %1042 = vmatpush1.bf16.msra.mxu0 %v854
    %1043 = vmatprep.subr.bf16.mxu0 0
    %1044 = vmatpush1.bf16.msra.mxu0 %v853
    %1045 = vmatprep.subr.bf16.mxu0 0
    %1046 = vmatpush2.bf16.msra.mxu0 0
    %1047 = vmatprep.subr.bf16.mxu0 0
    %1048 = vmatpush2.bf16.msra.mxu0 0
    %1049 = vmatprep.subr.bf16.mxu0 0
    %1050 = vmatpush2.bf16.msra.mxu0 0
    %1051 = vmatprep.subr.bf16.mxu0 0
    %1052 = vmatpush2.bf16.msra.mxu0 0
    %1053 = vmatprep.subr.bf16.mxu0 0
    %1054 = vmatpush2.bf16.msra.mxu0 0
    %1055 = vmatprep.subr.bf16.mxu0 0
    %1056 = vmatpush2.bf16.msra.mxu0 0
    %1057 = vmatprep.subr.bf16.mxu0 0
    %1058 = vmatpush2.bf16.msra.mxu0 0
    %1059 = vmatprep.subr.bf16.mxu0 0
    %1060 = vmatpush2.bf16.msra.mxu0 0
    %1061 = vmatprep.mubr.bf16.mxu0 0
    %1062 = vmatmul.mubr.bf16.gmra.mxu0 %v907
    %v1063 = vpop.f32.mrf.mxu0
    %v1064 = vadd.f32 %v1024, %v1063
    %v1065 = vpop.f32.mrf.mxu0
    %v1066 = vpop.f32.mrf.mxu0
    %v1067 = vpop.f32.mrf.mxu0
    %1068 = vdwg.mxu0
    %v1069 = vpack.c.bf16 %v1064, %v1064
    %v1070 = vld [vmem:[#allocation10] sm:$0xf]
    %v1071 = vld [vmem:[#allocation10 + $0x4] sm:$0xf]
    %v1072 = vld [vmem:[#allocation10 + $0x8] sm:$0xf]
    %v1073 = vld [vmem:[#allocation10 + $0xc] sm:$0xf]
    %v1074 = vld [vmem:[#allocation10 + $0x10] sm:$0xf]
    %v1075 = vld [vmem:[#allocation10 + $0x14] sm:$0xf]
    %v1076 = vld [vmem:[#allocation10 + $0x18] sm:$0xf]
    %v1077 = vld [vmem:[#allocation10 + $0x1c] sm:$0xf]
    %v1078 = vld [vmem:[#allocation10 + $0x20] sm:$0xf]
    %v1079 = vld [vmem:[#allocation10 + $0x24] sm:$0xf]
    %v1080 = vld [vmem:[#allocation10 + $0x28] sm:$0xf]
    %v1081 = vld [vmem:[#allocation10 + $0x2c] sm:$0xf]
    %v1082 = vld [vmem:[#allocation10 + $0x30] sm:$0xf]
    %v1083 = vld [vmem:[#allocation10 + $0x34] sm:$0xf]
    %v1084 = vld [vmem:[#allocation10 + $0x38] sm:$0xf]
    %v1085 = vld [vmem:[#allocation10 + $0x3c] sm:$0xf]
    %v1086 = vld [vmem:[%s11] sm:$0x1]
    %v1088 = vlaneseq
    %v1089 = vshrl.u32 %v1088, 7
    %v1090 = vsub.s32 0, %v1089
    %v1091 = vrot.slane %v1086, %v1090
    %v1109 = vunpack.c.l.b16 %v1070
    %v1110 = vunpack.c.l.b16 %v1071
    %v1111 = vunpack.c.l.b16 %v1072
    %v1112 = vunpack.c.l.b16 %v1073
    %v1113 = vunpack.c.l.b16 %v1074
    %v1114 = vunpack.c.l.b16 %v1075
    %v1115 = vunpack.c.l.b16 %v1076
    %v1116 = vunpack.c.l.b16 %v1077
    %v1117 = vunpack.c.l.b16 %v1078
    %v1118 = vunpack.c.l.b16 %v1079
    %v1119 = vunpack.c.l.b16 %v1080
    %v1120 = vunpack.c.l.b16 %v1081
    %v1121 = vunpack.c.l.b16 %v1082
    %v1122 = vunpack.c.l.b16 %v1083
    %v1123 = vunpack.c.l.b16 %v1084
    %v1124 = vunpack.c.l.b16 %v1085
    %v1125 = vpack.c.b16 %v1110, %v1109
    %v1126 = vpack.c.b16 %v1112, %v1111
    %v1127 = vpack.c.b16 %v1114, %v1113
    %v1128 = vpack.c.b16 %v1116, %v1115
    %v1129 = vpack.c.b16 %v1118, %v1117
    %v1130 = vpack.c.b16 %v1120, %v1119
    %v1131 = vpack.c.b16 %v1122, %v1121
    %v1132 = vpack.c.b16 %v1124, %v1123
    %1141 = vmatprep.subr.bf16.mxu0 0
    %1142 = vmatpush1.bf16.msra.mxu0 %v1132
    %1143 = vmatprep.subr.bf16.mxu0 0
    %1144 = vmatpush1.bf16.msra.mxu0 %v1131
    %1145 = vmatprep.subr.bf16.mxu0 0
    %1146 = vmatpush1.bf16.msra.mxu0 %v1130
    %1147 = vmatprep.subr.bf16.mxu0 0
    %1148 = vmatpush1.bf16.msra.mxu0 %v1129
    %1149 = vmatprep.subr.bf16.mxu0 0
    %1150 = vmatpush1.bf16.msra.mxu0 %v1128
    %1151 = vmatprep.subr.bf16.mxu0 0
    %1152 = vmatpush1.bf16.msra.mxu0 %v1127
    %1153 = vmatprep.subr.bf16.mxu0 0
    %1154 = vmatpush1.bf16.msra.mxu0 %v1126
    %1155 = vmatprep.subr.bf16.mxu0 0
    %1156 = vmatpush1.bf16.msra.mxu0 %v1125
    %1157 = vmatprep.subr.bf16.mxu0 0
    %1158 = vmatpush2.bf16.msra.mxu0 0
    %1159 = vmatprep.subr.bf16.mxu0 0
    %1160 = vmatpush2.bf16.msra.mxu0 0
    %1161 = vmatprep.subr.bf16.mxu0 0
    %1162 = vmatpush2.bf16.msra.mxu0 0
    %1163 = vmatprep.subr.bf16.mxu0 0
    %1164 = vmatpush2.bf16.msra.mxu0 0
    %1165 = vmatprep.subr.bf16.mxu0 0
    %1166 = vmatpush2.bf16.msra.mxu0 0
    %1167 = vmatprep.subr.bf16.mxu0 0
    %1168 = vmatpush2.bf16.msra.mxu0 0
    %1169 = vmatprep.subr.bf16.mxu0 0
    %1170 = vmatpush2.bf16.msra.mxu0 0
    %1171 = vmatprep.subr.bf16.mxu0 0
    %1172 = vmatpush2.bf16.msra.mxu0 0
    %1173 = vmatprep.mubr.bf16.mxu0 0
    %1174 = vmatmul.mubr.bf16.gmra.mxu0 %v1069
    %v1175 = vpop.f32.mrf.mxu0
    %v1176 = vadd.f32 %v1091, %v1175
    %v1177 = vpop.f32.mrf.mxu0
    %v1178 = vpop.f32.mrf.mxu0
    %v1179 = vpop.f32.mrf.mxu0
    %1180 = vdwg.mxu0
    %v1181 = vmax.f32 %v1176, 0.0
    %v1182 = vpack.c.bf16 %v1181, %v1181
    %v1183 = vld [vmem:[%s12] sm:$0xf]
    %v1184 = vld [vmem:[%s12 + $0x4] sm:$0xf]
    %v1185 = vld [vmem:[%s12 + $0x8] sm:$0xf]
    %v1186 = vld [vmem:[%s12 + $0xc] sm:$0xf]
    %v1187 = vld [vmem:[%s12 + $0x10] sm:$0xf]
    %v1188 = vld [vmem:[%s12 + $0x14] sm:$0xf]
    %v1189 = vld [vmem:[%s12 + $0x18] sm:$0xf]
    %v1190 = vld [vmem:[%s12 + $0x1c] sm:$0xf]
    %v1191 = vld [vmem:[%s12 + $0x20] sm:$0xf]
    %v1192 = vld [vmem:[%s12 + $0x24] sm:$0xf]
    %v1193 = vld [vmem:[%s12 + $0x28] sm:$0xf]
    %v1194 = vld [vmem:[%s12 + $0x2c] sm:$0xf]
    %v1195 = vld [vmem:[%s12 + $0x30] sm:$0xf]
    %v1196 = vld [vmem:[%s12 + $0x34] sm:$0xf]
    %v1197 = vld [vmem:[%s12 + $0x38] sm:$0xf]
    %v1198 = vld [vmem:[%s12 + $0x3c] sm:$0xf]
    %v1199 = vld [vmem:[%s13] sm:$0x1]
    %v1201 = vlaneseq
    %v1202 = vshrl.u32 %v1201, 7
    %v1203 = vsub.s32 0, %v1202
    %v1204 = vrot.slane %v1199, %v1203
    %v1222 = vunpack.c.l.b16 %v1183
    %v1223 = vunpack.c.l.b16 %v1184
    %v1224 = vunpack.c.l.b16 %v1185
    %v1225 = vunpack.c.l.b16 %v1186
    %v1226 = vunpack.c.l.b16 %v1187
    %v1227 = vunpack.c.l.b16 %v1188
    %v1228 = vunpack.c.l.b16 %v1189
    %v1229 = vunpack.c.l.b16 %v1190
    %v1230 = vunpack.c.l.b16 %v1191
    %v1231 = vunpack.c.l.b16 %v1192
    %v1232 = vunpack.c.l.b16 %v1193
    %v1233 = vunpack.c.l.b16 %v1194
    %v1234 = vunpack.c.l.b16 %v1195
    %v1235 = vunpack.c.l.b16 %v1196
    %v1236 = vunpack.c.l.b16 %v1197
    %v1237 = vunpack.c.l.b16 %v1198
    %v1238 = vpack.c.b16 %v1223, %v1222
    %v1239 = vpack.c.b16 %v1225, %v1224
    %v1240 = vpack.c.b16 %v1227, %v1226
    %v1241 = vpack.c.b16 %v1229, %v1228
    %v1242 = vpack.c.b16 %v1231, %v1230
    %v1243 = vpack.c.b16 %v1233, %v1232
    %v1244 = vpack.c.b16 %v1235, %v1234
    %v1245 = vpack.c.b16 %v1237, %v1236
    %1254 = vmatprep.subr.bf16.mxu0 0
    %1255 = vmatpush1.bf16.msra.mxu0 %v1245
    %1256 = vmatprep.subr.bf16.mxu0 0
    %1257 = vmatpush1.bf16.msra.mxu0 %v1244
    %1258 = vmatprep.subr.bf16.mxu0 0
    %1259 = vmatpush1.bf16.msra.mxu0 %v1243
    %1260 = vmatprep.subr.bf16.mxu0 0
    %1261 = vmatpush1.bf16.msra.mxu0 %v1242
    %1262 = vmatprep.subr.bf16.mxu0 0
    %1263 = vmatpush1.bf16.msra.mxu0 %v1241
    %1264 = vmatprep.subr.bf16.mxu0 0
    %1265 = vmatpush1.bf16.msra.mxu0 %v1240
    %1266 = vmatprep.subr.bf16.mxu0 0
    %1267 = vmatpush1.bf16.msra.mxu0 %v1239
    %1268 = vmatprep.subr.bf16.mxu0 0
    %1269 = vmatpush1.bf16.msra.mxu0 %v1238
    %1270 = vmatprep.subr.bf16.mxu0 0
    %1271 = vmatpush2.bf16.msra.mxu0 0
    %1272 = vmatprep.subr.bf16.mxu0 0
    %1273 = vmatpush2.bf16.msra.mxu0 0
    %1274 = vmatprep.subr.bf16.mxu0 0
    %1275 = vmatpush2.bf16.msra.mxu0 0
    %1276 = vmatprep.subr.bf16.mxu0 0
    %1277 = vmatpush2.bf16.msra.mxu0 0
    %1278 = vmatprep.subr.bf16.mxu0 0
    %1279 = vmatpush2.bf16.msra.mxu0 0
    %1280 = vmatprep.subr.bf16.mxu0 0
    %1281 = vmatpush2.bf16.msra.mxu0 0
    %1282 = vmatprep.subr.bf16.mxu0 0
    %1283 = vmatpush2.bf16.msra.mxu0 0
    %1284 = vmatprep.subr.bf16.mxu0 0
    %1285 = vmatpush2.bf16.msra.mxu0 0
    %1286 = vmatprep.mubr.bf16.mxu0 0
    %1287 = vmatmul.mubr.bf16.gmra.mxu0 %v1182
    %v1288 = vpop.f32.mrf.mxu0
    %v1289 = vadd.f32 %v1204, %v1288
    %v1290 = vpop.f32.mrf.mxu0
    %v1291 = vpop.f32.mrf.mxu0
    %v1292 = vpop.f32.mrf.mxu0
    %1293 = vdwg.mxu0
    %vm1294 = vcmask 15360
    %1295 = vst.msk [vmem:[%s14] sm:$0xff] %vm1294, %v1289
    // Predicated region
    $region82: #{tpu_custom_call.1} parent=1 // pred_check
      _
    $region83: #{tpu_custom_call.1} parent=1 // pred_check_branch
      %1297 = sbr.rel (0) target = $region85
    $region84: #{tpu_custom_call.1} parent=1 // pred_region
      _
    $region85: #{tpu_custom_call.1} parent=1 // pred_fallthru
      _
    // Predicated region
    $region86: #{tpu_custom_call.1} parent=1 // pred_check
      _
    $region87: #{tpu_custom_call.1} parent=1 // pred_check_branch
      %1299 = sbr.rel (0) target = $region89
    $region88: #{tpu_custom_call.1} parent=1 // pred_region
      _
    $region89: #{tpu_custom_call.1} parent=1 // pred_fallthru
      _
    // Predicated region
    $region90: #{tpu_custom_call.1} parent=1 // pred_check
      _
    $region91: #{tpu_custom_call.1} parent=1 // pred_check_branch
      %1301 = sbr.rel (0) target = $region93
    $region92: #{tpu_custom_call.1} parent=1 // pred_region
      _
    $region93: #{tpu_custom_call.1} parent=1 // pred_fallthru
      _
    // Predicated region
    $region94: #{tpu_custom_call.1} parent=1 // pred_check
      _
    $region95: #{tpu_custom_call.1} parent=1 // pred_check_branch
      %1303 = sbr.rel (0) target = $region97
    $region96: #{tpu_custom_call.1} parent=1 // pred_region
      _
    $region97: #{tpu_custom_call.1} parent=1 // pred_fallthru
      _
    %1304 = vsyncpa [#allocation3], 1
    %1305 = vsyncpa [#allocation5], 1
    %1306 = vsyncpa [#allocation8], 1
    %1307 = vsyncpa [#allocation11], 1

</llo_original>
